<compile_context>
chip_gen: v5e
topology: v5e:2x2
jax: 0.10.0
libtpu: 0.0.40
codegen_flags: <defaults>
</compile_context>

<pallas_src>
import functools
import math

import jax
import jax.numpy as jnp
from jax.experimental import pallas as pl
from jax.experimental.pallas import tpu as pltpu


# ----------------------------------------------------------------------------
# Fused TransformerBlock kernel: one grid step == Bblk sequences.
# ----------------------------------------------------------------------------
def transformer_block_kernel(
    x_ref,        # (Bblk*S, D)   f32   flattened activations
    m_ref,        # (Bblk, S, S)  f32   keep flags (1 = keep, 0 = masked)
    wqkv_ref,     # (D, 3D)       bf16  [Wq^T | Wk^T | Wv^T]
    wo_ref,       # (D, D)        bf16  Wo^T
    w1_ref,       # (D, Dff)      bf16  W1^T
    w2_ref,       # (Dff, D)      bf16  W2^T
    b1_ref,       # (1, Dff)      f32
    vec_ref,      # (5, D)        f32   rows = [ln1_g, ln1_b, ln2_g, ln2_b, b2]
    o_ref,        # (Bblk*S, D)
    *,
    num_heads: int,
    bblk: int,
    seq_len: int,
):
    S = seq_len
    M, D = x_ref.shape
    d_k = D // num_heads
    scale = 1.0 / math.sqrt(d_k)
    eps = 1e-5
    bf16 = jnp.bfloat16

    x = x_ref[...]                           # (M, D) f32
    keep3 = m_ref[...]                       # (Bblk, S, S) f32

    vecs = vec_ref[...]                      # (5, D) f32
    g1, be1, g2, be2, b2 = (vecs[0:1], vecs[1:2], vecs[2:3], vecs[3:4], vecs[4:5])
    b1 = b1_ref[...]                         # (1, Dff) f32

    def layer_norm(z, g, b):                 # f32 math (v5e: no bf16 VPU/EUP)
        mu = jnp.mean(z, axis=-1, keepdims=True)
        var = jnp.mean(jnp.square(z - mu), axis=-1, keepdims=True)
        return (z - mu) * jax.lax.rsqrt(var + eps) * g + b

    # -------------------- attention sublayer --------------------
    xn = layer_norm(x, g1, be1)                                        # (M, D) f32
    qkv = jnp.dot(xn.astype(bf16), wqkv_ref[...],
                  preferred_element_type=jnp.float32)                  # (M, 3D) f32

    acc = jnp.zeros((M, D), jnp.float32)
    for h in range(num_heads):                                         # static unroll
        lo = h * d_k
        qh = qkv[:, lo:lo + d_k].reshape(bblk, S, d_k).astype(bf16)
        kh = qkv[:, D + lo:D + lo + d_k].reshape(bblk, S, d_k).astype(bf16)
        vh = qkv[:, 2 * D + lo:2 * D + lo + d_k].reshape(bblk, S, d_k).astype(bf16)

        # Batched Q·Kᵀ over the Bblk sequences in this step.
        s = jnp.einsum("bqd,bkd->bqk", qh, kh,
                       preferred_element_type=jnp.float32) * scale     # (Bblk,S,S) f32

        # Masking folded into the exponentials (softmax is shift-invariant, so no -1e9
        # fill is needed); the clamp makes fully-masked rows output exact zeros.
        e = jnp.exp(s - jnp.max(s, axis=-1, keepdims=True)) * keep3
        denom = jnp.maximum(jnp.sum(e, axis=-1, keepdims=True), jnp.float32(1e-30))
        p = (e / denom).astype(bf16)                                   # exact reciprocal
        # (attention dropout skipped: eval-mode identity)

        oh = jnp.einsum("bqk,bkd->bqd", p, vh,
                        preferred_element_type=jnp.float32)            # (Bblk,S,d_k) f32

        # Fold the output projection per head: Wo row-slice is sublane-aligned; avoids the
        # lane-dim concat of sub-128 pieces.
        acc = acc + jnp.dot(oh.reshape(M, d_k).astype(bf16),
                            wo_ref[lo:lo + d_k, :],
                            preferred_element_type=jnp.float32)        # (M, D) f32

    x1 = x + acc                                                       # residual

    # -------------------- feed-forward sublayer --------------------
    xn2 = layer_norm(x1, g2, be2)
    h1 = jnp.dot(xn2.astype(bf16), w1_ref[...],
                 preferred_element_type=jnp.float32) + b1              # (M, Dff) f32
    h1 = jax.nn.gelu(h1, approximate=True)                             # tanh GELU (TODO)
    ff = jnp.dot(h1.astype(bf16), w2_ref[...],
                 preferred_element_type=jnp.float32) + b2              # (M, D) f32

    # x[~(mask.sum(-1) > 0)] = 0
    keep2 = keep3.reshape(M, S)
    row_keep = jnp.sum(keep2, axis=-1, keepdims=True) > 0.0            # (M, 1)
    ff = jnp.where(row_keep, ff, jnp.float32(0.0))

    o_ref[...] = (x1 + ff).astype(o_ref.dtype)                         # residual


# ----------------------------------------------------------------------------
# Wrapper
# ----------------------------------------------------------------------------
def _pick_bblk(B, S, target_rows):
    """Smallest divisor of B such that Bblk*S >= target_rows (else all of B)."""
    for cand in range(1, B + 1):
        if B % cand == 0 and cand * S >= target_rows:
            return cand
    return B


def _vmem_limit_bytes(bblk, S, D, d_ff):
    """Rough per-step VMEM budget (2x buffered I/O + weights + intermediates) with headroom."""
    M = bblk * S
    io = 2 * 2 * (M * D * 4) + 2 * (bblk * S * S * 4)                  # x/out + mask
    wts = 2 * 2 * (D * 3 * D + D * D + 2 * D * d_ff) + 2 * 4 * (5 * D + d_ff)
    act = 4 * (M * (3 * D + d_ff + 6 * D) + 4 * bblk * S * S)
    need = 2 * (io + wts + act)
    return int(min(max(need, 32 << 20), 64 << 20))                     # safe on v7x


def transformer_block(x, mask, params, num_heads, *, target_rows=256):
    """x: [B, S, D] f32, mask: [B, S, S] (0 = masked).  Returns [B, S, D] f32."""
    wqkv_t, wo_t, w1_t, w2_t, b1, vecs = params
    B, S, D = x.shape
    d_ff = w1_t.shape[1]

    keep = (mask != 0).astype(jnp.float32)          # keep flags (general B,S,S mask kept)

    # Block several sequences per grid step so GEMM M reaches 128 (v5e) / 256 (v6e/v7x).
    # (If megacore occupancy matters more than MXU fill on v7x, lower target_rows so the
    #  grid length stays >= 2.)
    bblk = _pick_bblk(B, S, target_rows)
    grid = (B // bblk,)
    M_blk = bblk * S

    x2d = x.reshape(B * S, D)                       # free contiguous reshape

    def c00(b):                                     # constant index: weights not re-fetched
        return (0, 0)

    kernel = functools.partial(transformer_block_kernel,
                               num_heads=num_heads, bblk=bblk, seq_len=S)

    out2d = pl.pallas_call(
        kernel,
        out_shape=jax.ShapeDtypeStruct((B * S, D), x.dtype),
        grid=grid,
        in_specs=[
            pl.BlockSpec((M_blk, D), lambda b: (b, 0)),        # x (flattened)
            pl.BlockSpec((bblk, S, S), lambda b: (b, 0, 0)),   # keep mask
            pl.BlockSpec((D, 3 * D), c00),                     # wqkv^T (bf16)
            pl.BlockSpec((D, D), c00),                         # wo^T   (bf16)
            pl.BlockSpec((D, d_ff), c00),                      # w1^T   (bf16)
            pl.BlockSpec((d_ff, D), c00),                      # w2^T   (bf16)
            pl.BlockSpec((1, d_ff), c00),                      # b1
            pl.BlockSpec((5, D), c00),                         # [g1,be1,g2,be2,b2]
        ],
        out_specs=pl.BlockSpec((M_blk, D), lambda b: (b, 0)),
        compiler_params=pltpu.CompilerParams(
            dimension_semantics=("parallel",),
            vmem_limit_bytes=_vmem_limit_bytes(bblk, S, D, d_ff)),
    )(x2d, keep, wqkv_t, wo_t, w1_t, w2_t, b1, vecs)

    return out2d.reshape(B, S, D)


# ----------------------------------------------------------------------------
# Pure-JAX reference (eval-mode TransformerBlock, same bf16 operand casts)
# ----------------------------------------------------------------------------
def reference_transformer_block(x, mask, params, num_heads):
    wqkv_t, wo_t, w1_t, w2_t, b1, vecs = params
    g1, be1, g2, be2, b2 = vecs[0], vecs[1], vecs[2], vecs[3], vecs[4]
    B, S, D = x.shape
    d_k = D // num_heads
    bf = jnp.bfloat16

    def ln(z, g, b):
        mu = z.mean(-1, keepdims=True)
        var = ((z - mu) ** 2).mean(-1, keepdims=True)
        return (z - mu) * jax.lax.rsqrt(var + 1e-5) * g + b

    keep = (mask != 0).astype(jnp.float32)

    xn = ln(x, g1, be1)
    qkv = jnp.dot(xn.astype(bf), wqkv_t, preferred_element_type=jnp.float32)
    q, k, v = jnp.split(qkv, 3, axis=-1)

    def heads(t):
        return t.reshape(B, S, num_heads, d_k).transpose(0, 2, 1, 3).astype(bf)

    q, k, v = heads(q), heads(k), heads(v)
    s = jnp.einsum("bhqd,bhkd->bhqk", q, k,
                   preferred_element_type=jnp.float32) / math.sqrt(d_k)
    km = keep[:, None, :, :]
    s = jnp.where(km > 0, s, -1e9)
    p = jax.nn.softmax(s, axis=-1) * km
    attn = jnp.einsum("bhqk,bhkd->bhqd", p.astype(bf), v,
                      preferred_element_type=jnp.float32)
    attn = attn.transpose(0, 2, 1, 3).reshape(B, S, D)
    attn = jnp.dot(attn.astype(bf), wo_t, preferred_element_type=jnp.float32)
    x1 = x + attn

    xn2 = ln(x1, g2, be2)
    h1 = jnp.dot(xn2.astype(bf), w1_t, preferred_element_type=jnp.float32) + b1
    h1 = jax.nn.gelu(h1, approximate=True)
    ff = jnp.dot(h1.astype(bf), w2_t, preferred_element_type=jnp.float32) + b2
    row_keep = (keep.sum(-1) > 0)[..., None]
    ff = jnp.where(row_keep, ff, 0.0)
    return x1 + ff


if __name__ == "__main__":
    B, S, d_model, h = 2, 8, 32, 4
    d_ff = 4 * d_model

    key0 = jax.random.PRNGKey(0)
    (kx, kwq, kwk, kwv, kwo, kw1, kb1, kw2, kb2,
     kg1, kbe1, kg2, kbe2) = jax.random.split(key0, 13)

    x = jax.random.normal(kx, (B, S, d_model), dtype=jnp.float32)

    # padding-style mask (0 = masked); sequence 1 has 3 fully-masked positions
    lengths = jnp.array([S, 5])
    valid = (jnp.arange(S)[None, :] < lengths[:, None]).astype(jnp.float32)   # (B, S)
    mask = valid[:, :, None] * valid[:, None, :]                              # (B, S, S)

    # PyTorch Linear convention weights: [out_features, in_features], y = x @ W.T (+ b)
    sc = 1.0 / math.sqrt(d_model)
    wq = jax.random.uniform(kwq, (d_model, d_model), jnp.float32, -sc, sc)
    wk = jax.random.uniform(kwk, (d_model, d_model), jnp.float32, -sc, sc)
    wv = jax.random.uniform(kwv, (d_model, d_model), jnp.float32, -sc, sc)
    wo = jax.random.uniform(kwo, (d_model, d_model), jnp.float32, -sc, sc)
    w1 = jax.random.uniform(kw1, (d_ff, d_model), jnp.float32, -sc, sc)
    b1 = jax.random.uniform(kb1, (d_ff,), jnp.float32, -sc, sc)
    scf = 1.0 / math.sqrt(d_ff)
    w2 = jax.random.uniform(kw2, (d_model, d_ff), jnp.float32, -scf, scf)
    b2 = jax.random.uniform(kb2, (d_model,), jnp.float32, -scf, scf)
    g1 = 1.0 + 0.1 * jax.random.normal(kg1, (d_model,), jnp.float32)
    be1 = 0.1 * jax.random.normal(kbe1, (d_model,), jnp.float32)
    g2 = 1.0 + 0.1 * jax.random.normal(kg2, (d_model,), jnp.float32)
    be2 = 0.1 * jax.random.normal(kbe2, (d_model,), jnp.float32)

    # One-time parameter packing / transposition / bf16 cast (outside the hot path).
    params = (
        jnp.concatenate([wq.T, wk.T, wv.T], axis=1).astype(jnp.bfloat16),  # (D, 3D)
        wo.T.astype(jnp.bfloat16),                                          # (D, D)
        w1.T.astype(jnp.bfloat16),                                          # (D, Dff)
        w2.T.astype(jnp.bfloat16),                                          # (Dff, D)
        b1.reshape(1, d_ff),                                                # f32
        jnp.stack([g1, be1, g2, be2, b2]),                                  # (5, D) f32
    )

    out = transformer_block(x, mask, params, h)
    out = jax.block_until_ready(out)

    ref = reference_transformer_block(x, mask, params, h)
    assert out.shape == (B, S, d_model)
    assert jnp.allclose(out, ref, atol=5e-3, rtol=5e-3), (
        float(jnp.max(jnp.abs(out - ref))))

    print("KERNEL_OK")
</pallas_src>

<mosaic_0001>
module attributes {stable_mosaic.version = 11 : i64} {
  func.func @transformer_block_kernel(%arg0: i32, %arg1: memref<16x32xf32, #tpu.memory_space<vmem>>, %arg2: memref<2x8x8xf32, #tpu.memory_space<vmem>>, %arg3: memref<32x96xbf16, #tpu.memory_space<vmem>>, %arg4: memref<32x32xbf16, #tpu.memory_space<vmem>>, %arg5: memref<32x128xbf16, #tpu.memory_space<vmem>>, %arg6: memref<128x32xbf16, #tpu.memory_space<vmem>>, %arg7: memref<1x128xf32, #tpu.memory_space<vmem>>, %arg8: memref<5x32xf32, #tpu.memory_space<vmem>>, %arg9: memref<16x32xf32, #tpu.memory_space<vmem>>) attributes {dimension_semantics = [#tpu.dimension_semantics<parallel>], iteration_bounds = array<i64: 1>, scalar_prefetch = 0 : i64, scratch_operands = 0 : i64, tpu.core_type = #tpu.core_type<tc>, window_params = [{transform_indices = @transform_0, window_bounds = array<i64: 16, 32>}, {transform_indices = @transform_1, window_bounds = array<i64: 2, 8, 8>}, {pipeline_mode = #tpu.pipeline_mode<synchronous>, transform_indices = @transform_2, window_bounds = array<i64: 32, 96>}, {pipeline_mode = #tpu.pipeline_mode<synchronous>, transform_indices = @transform_3, window_bounds = array<i64: 32, 32>}, {pipeline_mode = #tpu.pipeline_mode<synchronous>, transform_indices = @transform_4, window_bounds = array<i64: 32, 128>}, {pipeline_mode = #tpu.pipeline_mode<synchronous>, transform_indices = @transform_5, window_bounds = array<i64: 128, 32>}, {pipeline_mode = #tpu.pipeline_mode<synchronous>, transform_indices = @transform_6, window_bounds = array<i64: 1, 128>}, {pipeline_mode = #tpu.pipeline_mode<synchronous>, transform_indices = @transform_7, window_bounds = array<i64: 5, 32>}, {transform_indices = @transform_8, window_bounds = array<i64: 16, 32>}]} {
    %c0 = arith.constant 0 : index
    %c0_0 = arith.constant 0 : index
    %0 = vector.load %arg1[%c0, %c0_0] : memref<16x32xf32, #tpu.memory_space<vmem>>, vector<16x32xf32>
    %c0_1 = arith.constant 0 : index
    %c0_2 = arith.constant 0 : index
    %c0_3 = arith.constant 0 : index
    %1 = vector.load %arg2[%c0_1, %c0_2, %c0_3] : memref<2x8x8xf32, #tpu.memory_space<vmem>>, vector<2x8x8xf32>
    %c0_4 = arith.constant 0 : index
    %c0_5 = arith.constant 0 : index
    %2 = vector.load %arg8[%c0_4, %c0_5] : memref<5x32xf32, #tpu.memory_space<vmem>>, vector<5x32xf32>
    %3 = vector.extract_strided_slice %2 {offsets = [0, 0], sizes = [1, 32], strides = [1, 1]} : vector<5x32xf32> to vector<1x32xf32>
    %4 = vector.extract_strided_slice %2 {offsets = [1, 0], sizes = [1, 32], strides = [1, 1]} : vector<5x32xf32> to vector<1x32xf32>
    %5 = vector.extract_strided_slice %2 {offsets = [2, 0], sizes = [1, 32], strides = [1, 1]} : vector<5x32xf32> to vector<1x32xf32>
    %6 = vector.extract_strided_slice %2 {offsets = [3, 0], sizes = [1, 32], strides = [1, 1]} : vector<5x32xf32> to vector<1x32xf32>
    %7 = vector.extract_strided_slice %2 {offsets = [4, 0], sizes = [1, 32], strides = [1, 1]} : vector<5x32xf32> to vector<1x32xf32>
    %c0_6 = arith.constant 0 : index
    %c0_7 = arith.constant 0 : index
    %8 = vector.load %arg7[%c0_6, %c0_7] : memref<1x128xf32, #tpu.memory_space<vmem>>, vector<1x128xf32>
    %cst = arith.constant dense<0.000000e+00> : vector<16xf32>
    %9 = vector.multi_reduction <add>, %0, %cst [1] : vector<16x32xf32> to vector<16xf32>
    %10 = vector.shape_cast %9 : vector<16xf32> to vector<16x1xf32>
    %cst_8 = arith.constant 3.200000e+01 : f32
    %11 = vector.broadcast %cst_8 : f32 to vector<16x1xf32>
    %12 = arith.divf %10, %11 : vector<16x1xf32>
    %13 = vector.broadcast %12 : vector<16x1xf32> to vector<16x32xf32>
    %14 = arith.subf %0, %13 : vector<16x32xf32>
    %15 = arith.mulf %14, %14 : vector<16x32xf32>
    %cst_9 = arith.constant dense<0.000000e+00> : vector<16xf32>
    %16 = vector.multi_reduction <add>, %15, %cst_9 [1] : vector<16x32xf32> to vector<16xf32>
    %17 = vector.shape_cast %16 : vector<16xf32> to vector<16x1xf32>
    %cst_10 = arith.constant 3.200000e+01 : f32
    %18 = vector.broadcast %cst_10 : f32 to vector<16x1xf32>
    %19 = arith.divf %17, %18 : vector<16x1xf32>
    %20 = vector.broadcast %12 : vector<16x1xf32> to vector<16x32xf32>
    %21 = arith.subf %0, %20 : vector<16x32xf32>
    %cst_11 = arith.constant 9.99999974E-6 : f32
    %22 = vector.broadcast %cst_11 : f32 to vector<16x1xf32>
    %23 = arith.addf %19, %22 : vector<16x1xf32>
    %24 = math.rsqrt %23 : vector<16x1xf32>
    %25 = vector.broadcast %24 : vector<16x1xf32> to vector<16x32xf32>
    %26 = arith.mulf %21, %25 : vector<16x32xf32>
    %27 = vector.broadcast %3 : vector<1x32xf32> to vector<16x32xf32>
    %28 = arith.mulf %26, %27 : vector<16x32xf32>
    %29 = vector.broadcast %4 : vector<1x32xf32> to vector<16x32xf32>
    %30 = arith.addf %28, %29 : vector<16x32xf32>
    %31 = arith.truncf %30 : vector<16x32xf32> to vector<16x32xbf16>
    %c0_12 = arith.constant 0 : index
    %c0_13 = arith.constant 0 : index
    %32 = vector.load %arg3[%c0_12, %c0_13] : memref<32x96xbf16, #tpu.memory_space<vmem>>, vector<32x96xbf16>
    %cst_14 = arith.constant dense<0.000000e+00> : vector<16x96xf32>
    %33 = tpu.matmul %31, %32, %cst_14 {dimension_numbers = #tpu.dot_dimension_numbers<[1], [0], [0], [1], [0, 0, 1, 1], [], []>} : vector<16x32xbf16>, vector<32x96xbf16>, vector<16x96xf32> -> vector<16x96xf32>
    %cst_15 = arith.constant 0.000000e+00 : f32
    %34 = vector.broadcast %cst_15 : f32 to vector<16x32xf32>
    %35 = vector.extract_strided_slice %33 {offsets = [0, 0], sizes = [16, 8], strides = [1, 1]} : vector<16x96xf32> to vector<16x8xf32>
    %36 = vector.shape_cast %35 : vector<16x8xf32> to vector<2x8x8xf32>
    %37 = arith.truncf %36 : vector<2x8x8xf32> to vector<2x8x8xbf16>
    %38 = vector.extract_strided_slice %33 {offsets = [0, 32], sizes = [16, 8], strides = [1, 1]} : vector<16x96xf32> to vector<16x8xf32>
    %39 = vector.shape_cast %38 : vector<16x8xf32> to vector<2x8x8xf32>
    %40 = arith.truncf %39 : vector<2x8x8xf32> to vector<2x8x8xbf16>
    %41 = vector.extract_strided_slice %33 {offsets = [0, 64], sizes = [16, 8], strides = [1, 1]} : vector<16x96xf32> to vector<16x8xf32>
    %42 = vector.shape_cast %41 : vector<16x8xf32> to vector<2x8x8xf32>
    %43 = arith.truncf %42 : vector<2x8x8xf32> to vector<2x8x8xbf16>
    "tpu.trace_start"() <{level = 10 : i32, message = "bqd,bkd->bqk"}> : () -> ()
    %cst_16 = arith.constant dense<0.000000e+00> : vector<2x8x8xf32>
    %44 = tpu.matmul %37, %40, %cst_16 {dimension_numbers = #tpu.dot_dimension_numbers<[2], [2], [1], [1], [0, 0, 0, 1, 1, 1], [0], [0]>} : vector<2x8x8xbf16>, vector<2x8x8xbf16>, vector<2x8x8xf32> -> vector<2x8x8xf32>
    "tpu.trace_stop"() : () -> ()
    %cst_17 = arith.constant 0.353553385 : f32
    %45 = vector.broadcast %cst_17 : f32 to vector<2x8x8xf32>
    %46 = arith.mulf %44, %45 : vector<2x8x8xf32>
    %cst_18 = arith.constant dense<0xFF800000> : vector<2x8xf32>
    %47 = vector.multi_reduction <maximumf>, %46, %cst_18 [2] : vector<2x8x8xf32> to vector<2x8xf32>
    %48 = vector.shape_cast %47 : vector<2x8xf32> to vector<2x8x1xf32>
    %49 = vector.broadcast %48 : vector<2x8x1xf32> to vector<2x8x8xf32>
    %50 = arith.subf %46, %49 : vector<2x8x8xf32>
    %51 = math.exp %50 : vector<2x8x8xf32>
    %52 = arith.mulf %51, %1 : vector<2x8x8xf32>
    %cst_19 = arith.constant dense<0.000000e+00> : vector<2x8xf32>
    %53 = vector.multi_reduction <add>, %52, %cst_19 [2] : vector<2x8x8xf32> to vector<2x8xf32>
    %54 = vector.shape_cast %53 : vector<2x8xf32> to vector<2x8x1xf32>
    %cst_20 = arith.constant 1.000000e-30 : f32
    %55 = vector.broadcast %cst_20 : f32 to vector<2x8x1xf32>
    %56 = arith.maximumf %54, %55 : vector<2x8x1xf32>
    %57 = vector.broadcast %56 : vector<2x8x1xf32> to vector<2x8x8xf32>
    %58 = arith.divf %52, %57 : vector<2x8x8xf32>
    %59 = arith.truncf %58 : vector<2x8x8xf32> to vector<2x8x8xbf16>
    "tpu.trace_start"() <{level = 10 : i32, message = "bqk,bkd->bqd"}> : () -> ()
    %cst_21 = arith.constant dense<0.000000e+00> : vector<2x8x8xf32>
    %60 = tpu.matmul %59, %43, %cst_21 {dimension_numbers = #tpu.dot_dimension_numbers<[2], [1], [1], [2], [0, 0, 0, 1, 1, 2], [0], [0]>} : vector<2x8x8xbf16>, vector<2x8x8xbf16>, vector<2x8x8xf32> -> vector<2x8x8xf32>
    "tpu.trace_stop"() : () -> ()
    %61 = vector.shape_cast %60 : vector<2x8x8xf32> to vector<16x8xf32>
    %62 = arith.truncf %61 : vector<16x8xf32> to vector<16x8xbf16>
    %c0_22 = arith.constant 0 : index
    %c0_23 = arith.constant 0 : index
    %63 = vector.load %arg4[%c0_22, %c0_23] : memref<32x32xbf16, #tpu.memory_space<vmem>>, vector<8x32xbf16>
    %cst_24 = arith.constant dense<0.000000e+00> : vector<16x32xf32>
    %64 = tpu.matmul %62, %63, %cst_24 {dimension_numbers = #tpu.dot_dimension_numbers<[1], [0], [0], [1], [0, 0, 1, 1], [], []>} : vector<16x8xbf16>, vector<8x32xbf16>, vector<16x32xf32> -> vector<16x32xf32>
    %65 = arith.addf %34, %64 : vector<16x32xf32>
    %66 = vector.extract_strided_slice %33 {offsets = [0, 8], sizes = [16, 8], strides = [1, 1]} : vector<16x96xf32> to vector<16x8xf32>
    %67 = vector.shape_cast %66 : vector<16x8xf32> to vector<2x8x8xf32>
    %68 = arith.truncf %67 : vector<2x8x8xf32> to vector<2x8x8xbf16>
    %69 = vector.extract_strided_slice %33 {offsets = [0, 40], sizes = [16, 8], strides = [1, 1]} : vector<16x96xf32> to vector<16x8xf32>
    %70 = vector.shape_cast %69 : vector<16x8xf32> to vector<2x8x8xf32>
    %71 = arith.truncf %70 : vector<2x8x8xf32> to vector<2x8x8xbf16>
    %72 = vector.extract_strided_slice %33 {offsets = [0, 72], sizes = [16, 8], strides = [1, 1]} : vector<16x96xf32> to vector<16x8xf32>
    %73 = vector.shape_cast %72 : vector<16x8xf32> to vector<2x8x8xf32>
    %74 = arith.truncf %73 : vector<2x8x8xf32> to vector<2x8x8xbf16>
    "tpu.trace_start"() <{level = 10 : i32, message = "bqd,bkd->bqk"}> : () -> ()
    %cst_25 = arith.constant dense<0.000000e+00> : vector<2x8x8xf32>
    %75 = tpu.matmul %68, %71, %cst_25 {dimension_numbers = #tpu.dot_dimension_numbers<[2], [2], [1], [1], [0, 0, 0, 1, 1, 1], [0], [0]>} : vector<2x8x8xbf16>, vector<2x8x8xbf16>, vector<2x8x8xf32> -> vector<2x8x8xf32>
    "tpu.trace_stop"() : () -> ()
    %cst_26 = arith.constant 0.353553385 : f32
    %76 = vector.broadcast %cst_26 : f32 to vector<2x8x8xf32>
    %77 = arith.mulf %75, %76 : vector<2x8x8xf32>
    %cst_27 = arith.constant dense<0xFF800000> : vector<2x8xf32>
    %78 = vector.multi_reduction <maximumf>, %77, %cst_27 [2] : vector<2x8x8xf32> to vector<2x8xf32>
    %79 = vector.shape_cast %78 : vector<2x8xf32> to vector<2x8x1xf32>
    %80 = vector.broadcast %79 : vector<2x8x1xf32> to vector<2x8x8xf32>
    %81 = arith.subf %77, %80 : vector<2x8x8xf32>
    %82 = math.exp %81 : vector<2x8x8xf32>
    %83 = arith.mulf %82, %1 : vector<2x8x8xf32>
    %cst_28 = arith.constant dense<0.000000e+00> : vector<2x8xf32>
    %84 = vector.multi_reduction <add>, %83, %cst_28 [2] : vector<2x8x8xf32> to vector<2x8xf32>
    %85 = vector.shape_cast %84 : vector<2x8xf32> to vector<2x8x1xf32>
    %cst_29 = arith.constant 1.000000e-30 : f32
    %86 = vector.broadcast %cst_29 : f32 to vector<2x8x1xf32>
    %87 = arith.maximumf %85, %86 : vector<2x8x1xf32>
    %88 = vector.broadcast %87 : vector<2x8x1xf32> to vector<2x8x8xf32>
    %89 = arith.divf %83, %88 : vector<2x8x8xf32>
    %90 = arith.truncf %89 : vector<2x8x8xf32> to vector<2x8x8xbf16>
    "tpu.trace_start"() <{level = 10 : i32, message = "bqk,bkd->bqd"}> : () -> ()
    %cst_30 = arith.constant dense<0.000000e+00> : vector<2x8x8xf32>
    %91 = tpu.matmul %90, %74, %cst_30 {dimension_numbers = #tpu.dot_dimension_numbers<[2], [1], [1], [2], [0, 0, 0, 1, 1, 2], [0], [0]>} : vector<2x8x8xbf16>, vector<2x8x8xbf16>, vector<2x8x8xf32> -> vector<2x8x8xf32>
    "tpu.trace_stop"() : () -> ()
    %92 = vector.shape_cast %91 : vector<2x8x8xf32> to vector<16x8xf32>
    %93 = arith.truncf %92 : vector<16x8xf32> to vector<16x8xbf16>
    %c8 = arith.constant 8 : index
    %c0_31 = arith.constant 0 : index
    %94 = vector.load %arg4[%c8, %c0_31] : memref<32x32xbf16, #tpu.memory_space<vmem>>, vector<8x32xbf16>
    %cst_32 = arith.constant dense<0.000000e+00> : vector<16x32xf32>
    %95 = tpu.matmul %93, %94, %cst_32 {dimension_numbers = #tpu.dot_dimension_numbers<[1], [0], [0], [1], [0, 0, 1, 1], [], []>} : vector<16x8xbf16>, vector<8x32xbf16>, vector<16x32xf32> -> vector<16x32xf32>
    %96 = arith.addf %65, %95 : vector<16x32xf32>
    %97 = vector.extract_strided_slice %33 {offsets = [0, 16], sizes = [16, 8], strides = [1, 1]} : vector<16x96xf32> to vector<16x8xf32>
    %98 = vector.shape_cast %97 : vector<16x8xf32> to vector<2x8x8xf32>
    %99 = arith.truncf %98 : vector<2x8x8xf32> to vector<2x8x8xbf16>
    %100 = vector.extract_strided_slice %33 {offsets = [0, 48], sizes = [16, 8], strides = [1, 1]} : vector<16x96xf32> to vector<16x8xf32>
    %101 = vector.shape_cast %100 : vector<16x8xf32> to vector<2x8x8xf32>
    %102 = arith.truncf %101 : vector<2x8x8xf32> to vector<2x8x8xbf16>
    %103 = vector.extract_strided_slice %33 {offsets = [0, 80], sizes = [16, 8], strides = [1, 1]} : vector<16x96xf32> to vector<16x8xf32>
    %104 = vector.shape_cast %103 : vector<16x8xf32> to vector<2x8x8xf32>
    %105 = arith.truncf %104 : vector<2x8x8xf32> to vector<2x8x8xbf16>
    "tpu.trace_start"() <{level = 10 : i32, message = "bqd,bkd->bqk"}> : () -> ()
    %cst_33 = arith.constant dense<0.000000e+00> : vector<2x8x8xf32>
    %106 = tpu.matmul %99, %102, %cst_33 {dimension_numbers = #tpu.dot_dimension_numbers<[2], [2], [1], [1], [0, 0, 0, 1, 1, 1], [0], [0]>} : vector<2x8x8xbf16>, vector<2x8x8xbf16>, vector<2x8x8xf32> -> vector<2x8x8xf32>
    "tpu.trace_stop"() : () -> ()
    %cst_34 = arith.constant 0.353553385 : f32
    %107 = vector.broadcast %cst_34 : f32 to vector<2x8x8xf32>
    %108 = arith.mulf %106, %107 : vector<2x8x8xf32>
    %cst_35 = arith.constant dense<0xFF800000> : vector<2x8xf32>
    %109 = vector.multi_reduction <maximumf>, %108, %cst_35 [2] : vector<2x8x8xf32> to vector<2x8xf32>
    %110 = vector.shape_cast %109 : vector<2x8xf32> to vector<2x8x1xf32>
    %111 = vector.broadcast %110 : vector<2x8x1xf32> to vector<2x8x8xf32>
    %112 = arith.subf %108, %111 : vector<2x8x8xf32>
    %113 = math.exp %112 : vector<2x8x8xf32>
    %114 = arith.mulf %113, %1 : vector<2x8x8xf32>
    %cst_36 = arith.constant dense<0.000000e+00> : vector<2x8xf32>
    %115 = vector.multi_reduction <add>, %114, %cst_36 [2] : vector<2x8x8xf32> to vector<2x8xf32>
    %116 = vector.shape_cast %115 : vector<2x8xf32> to vector<2x8x1xf32>
    %cst_37 = arith.constant 1.000000e-30 : f32
    %117 = vector.broadcast %cst_37 : f32 to vector<2x8x1xf32>
    %118 = arith.maximumf %116, %117 : vector<2x8x1xf32>
    %119 = vector.broadcast %118 : vector<2x8x1xf32> to vector<2x8x8xf32>
    %120 = arith.divf %114, %119 : vector<2x8x8xf32>
    %121 = arith.truncf %120 : vector<2x8x8xf32> to vector<2x8x8xbf16>
    "tpu.trace_start"() <{level = 10 : i32, message = "bqk,bkd->bqd"}> : () -> ()
    %cst_38 = arith.constant dense<0.000000e+00> : vector<2x8x8xf32>
    %122 = tpu.matmul %121, %105, %cst_38 {dimension_numbers = #tpu.dot_dimension_numbers<[2], [1], [1], [2], [0, 0, 0, 1, 1, 2], [0], [0]>} : vector<2x8x8xbf16>, vector<2x8x8xbf16>, vector<2x8x8xf32> -> vector<2x8x8xf32>
    "tpu.trace_stop"() : () -> ()
    %123 = vector.shape_cast %122 : vector<2x8x8xf32> to vector<16x8xf32>
    %124 = arith.truncf %123 : vector<16x8xf32> to vector<16x8xbf16>
    %c16 = arith.constant 16 : index
    %c0_39 = arith.constant 0 : index
    %125 = vector.load %arg4[%c16, %c0_39] : memref<32x32xbf16, #tpu.memory_space<vmem>>, vector<8x32xbf16>
    %cst_40 = arith.constant dense<0.000000e+00> : vector<16x32xf32>
    %126 = tpu.matmul %124, %125, %cst_40 {dimension_numbers = #tpu.dot_dimension_numbers<[1], [0], [0], [1], [0, 0, 1, 1], [], []>} : vector<16x8xbf16>, vector<8x32xbf16>, vector<16x32xf32> -> vector<16x32xf32>
    %127 = arith.addf %96, %126 : vector<16x32xf32>
    %128 = vector.extract_strided_slice %33 {offsets = [0, 24], sizes = [16, 8], strides = [1, 1]} : vector<16x96xf32> to vector<16x8xf32>
    %129 = vector.shape_cast %128 : vector<16x8xf32> to vector<2x8x8xf32>
    %130 = arith.truncf %129 : vector<2x8x8xf32> to vector<2x8x8xbf16>
    %131 = vector.extract_strided_slice %33 {offsets = [0, 56], sizes = [16, 8], strides = [1, 1]} : vector<16x96xf32> to vector<16x8xf32>
    %132 = vector.shape_cast %131 : vector<16x8xf32> to vector<2x8x8xf32>
    %133 = arith.truncf %132 : vector<2x8x8xf32> to vector<2x8x8xbf16>
    %134 = vector.extract_strided_slice %33 {offsets = [0, 88], sizes = [16, 8], strides = [1, 1]} : vector<16x96xf32> to vector<16x8xf32>
    %135 = vector.shape_cast %134 : vector<16x8xf32> to vector<2x8x8xf32>
    %136 = arith.truncf %135 : vector<2x8x8xf32> to vector<2x8x8xbf16>
    "tpu.trace_start"() <{level = 10 : i32, message = "bqd,bkd->bqk"}> : () -> ()
    %cst_41 = arith.constant dense<0.000000e+00> : vector<2x8x8xf32>
    %137 = tpu.matmul %130, %133, %cst_41 {dimension_numbers = #tpu.dot_dimension_numbers<[2], [2], [1], [1], [0, 0, 0, 1, 1, 1], [0], [0]>} : vector<2x8x8xbf16>, vector<2x8x8xbf16>, vector<2x8x8xf32> -> vector<2x8x8xf32>
    "tpu.trace_stop"() : () -> ()
    %cst_42 = arith.constant 0.353553385 : f32
    %138 = vector.broadcast %cst_42 : f32 to vector<2x8x8xf32>
    %139 = arith.mulf %137, %138 : vector<2x8x8xf32>
    %cst_43 = arith.constant dense<0xFF800000> : vector<2x8xf32>
    %140 = vector.multi_reduction <maximumf>, %139, %cst_43 [2] : vector<2x8x8xf32> to vector<2x8xf32>
    %141 = vector.shape_cast %140 : vector<2x8xf32> to vector<2x8x1xf32>
    %142 = vector.broadcast %141 : vector<2x8x1xf32> to vector<2x8x8xf32>
    %143 = arith.subf %139, %142 : vector<2x8x8xf32>
    %144 = math.exp %143 : vector<2x8x8xf32>
    %145 = arith.mulf %144, %1 : vector<2x8x8xf32>
    %cst_44 = arith.constant dense<0.000000e+00> : vector<2x8xf32>
    %146 = vector.multi_reduction <add>, %145, %cst_44 [2] : vector<2x8x8xf32> to vector<2x8xf32>
    %147 = vector.shape_cast %146 : vector<2x8xf32> to vector<2x8x1xf32>
    %cst_45 = arith.constant 1.000000e-30 : f32
    %148 = vector.broadcast %cst_45 : f32 to vector<2x8x1xf32>
    %149 = arith.maximumf %147, %148 : vector<2x8x1xf32>
    %150 = vector.broadcast %149 : vector<2x8x1xf32> to vector<2x8x8xf32>
    %151 = arith.divf %145, %150 : vector<2x8x8xf32>
    %152 = arith.truncf %151 : vector<2x8x8xf32> to vector<2x8x8xbf16>
    "tpu.trace_start"() <{level = 10 : i32, message = "bqk,bkd->bqd"}> : () -> ()
    %cst_46 = arith.constant dense<0.000000e+00> : vector<2x8x8xf32>
    %153 = tpu.matmul %152, %136, %cst_46 {dimension_numbers = #tpu.dot_dimension_numbers<[2], [1], [1], [2], [0, 0, 0, 1, 1, 2], [0], [0]>} : vector<2x8x8xbf16>, vector<2x8x8xbf16>, vector<2x8x8xf32> -> vector<2x8x8xf32>
    "tpu.trace_stop"() : () -> ()
    %154 = vector.shape_cast %153 : vector<2x8x8xf32> to vector<16x8xf32>
    %155 = arith.truncf %154 : vector<16x8xf32> to vector<16x8xbf16>
    %c24 = arith.constant 24 : index
    %c0_47 = arith.constant 0 : index
    %156 = vector.load %arg4[%c24, %c0_47] : memref<32x32xbf16, #tpu.memory_space<vmem>>, vector<8x32xbf16>
    %cst_48 = arith.constant dense<0.000000e+00> : vector<16x32xf32>
    %157 = tpu.matmul %155, %156, %cst_48 {dimension_numbers = #tpu.dot_dimension_numbers<[1], [0], [0], [1], [0, 0, 1, 1], [], []>} : vector<16x8xbf16>, vector<8x32xbf16>, vector<16x32xf32> -> vector<16x32xf32>
    %158 = arith.addf %127, %157 : vector<16x32xf32>
    %159 = arith.addf %0, %158 : vector<16x32xf32>
    %cst_49 = arith.constant dense<0.000000e+00> : vector<16xf32>
    %160 = vector.multi_reduction <add>, %159, %cst_49 [1] : vector<16x32xf32> to vector<16xf32>
    %161 = vector.shape_cast %160 : vector<16xf32> to vector<16x1xf32>
    %cst_50 = arith.constant 3.200000e+01 : f32
    %162 = vector.broadcast %cst_50 : f32 to vector<16x1xf32>
    %163 = arith.divf %161, %162 : vector<16x1xf32>
    %164 = vector.broadcast %163 : vector<16x1xf32> to vector<16x32xf32>
    %165 = arith.subf %159, %164 : vector<16x32xf32>
    %166 = arith.mulf %165, %165 : vector<16x32xf32>
    %cst_51 = arith.constant dense<0.000000e+00> : vector<16xf32>
    %167 = vector.multi_reduction <add>, %166, %cst_51 [1] : vector<16x32xf32> to vector<16xf32>
    %168 = vector.shape_cast %167 : vector<16xf32> to vector<16x1xf32>
    %cst_52 = arith.constant 3.200000e+01 : f32
    %169 = vector.broadcast %cst_52 : f32 to vector<16x1xf32>
    %170 = arith.divf %168, %169 : vector<16x1xf32>
    %171 = vector.broadcast %163 : vector<16x1xf32> to vector<16x32xf32>
    %172 = arith.subf %159, %171 : vector<16x32xf32>
    %cst_53 = arith.constant 9.99999974E-6 : f32
    %173 = vector.broadcast %cst_53 : f32 to vector<16x1xf32>
    %174 = arith.addf %170, %173 : vector<16x1xf32>
    %175 = math.rsqrt %174 : vector<16x1xf32>
    %176 = vector.broadcast %175 : vector<16x1xf32> to vector<16x32xf32>
    %177 = arith.mulf %172, %176 : vector<16x32xf32>
    %178 = vector.broadcast %5 : vector<1x32xf32> to vector<16x32xf32>
    %179 = arith.mulf %177, %178 : vector<16x32xf32>
    %180 = vector.broadcast %6 : vector<1x32xf32> to vector<16x32xf32>
    %181 = arith.addf %179, %180 : vector<16x32xf32>
    %182 = arith.truncf %181 : vector<16x32xf32> to vector<16x32xbf16>
    %c0_54 = arith.constant 0 : index
    %c0_55 = arith.constant 0 : index
    %183 = vector.load %arg5[%c0_54, %c0_55] : memref<32x128xbf16, #tpu.memory_space<vmem>>, vector<32x128xbf16>
    %cst_56 = arith.constant dense<0.000000e+00> : vector<16x128xf32>
    %184 = tpu.matmul %182, %183, %cst_56 {dimension_numbers = #tpu.dot_dimension_numbers<[1], [0], [0], [1], [0, 0, 1, 1], [], []>} : vector<16x32xbf16>, vector<32x128xbf16>, vector<16x128xf32> -> vector<16x128xf32>
    %185 = vector.broadcast %8 : vector<1x128xf32> to vector<16x128xf32>
    %186 = arith.addf %184, %185 : vector<16x128xf32>
    %187 = arith.mulf %186, %186 : vector<16x128xf32>
    %188 = arith.mulf %186, %187 : vector<16x128xf32>
    %cst_57 = arith.constant 4.471500e-02 : f32
    %189 = vector.broadcast %cst_57 : f32 to vector<16x128xf32>
    %190 = arith.mulf %189, %188 : vector<16x128xf32>
    %191 = arith.addf %186, %190 : vector<16x128xf32>
    %cst_58 = arith.constant 0.797884583 : f32
    %192 = vector.broadcast %cst_58 : f32 to vector<16x128xf32>
    %193 = arith.mulf %192, %191 : vector<16x128xf32>
    %194 = math.tanh %193 : vector<16x128xf32>
    %cst_59 = arith.constant 1.000000e+00 : f32
    %195 = vector.broadcast %cst_59 : f32 to vector<16x128xf32>
    %196 = arith.addf %195, %194 : vector<16x128xf32>
    %cst_60 = arith.constant 5.000000e-01 : f32
    %197 = vector.broadcast %cst_60 : f32 to vector<16x128xf32>
    %198 = arith.mulf %197, %196 : vector<16x128xf32>
    %199 = arith.mulf %186, %198 : vector<16x128xf32>
    %200 = arith.truncf %199 : vector<16x128xf32> to vector<16x128xbf16>
    %c0_61 = arith.constant 0 : index
    %c0_62 = arith.constant 0 : index
    %201 = vector.load %arg6[%c0_61, %c0_62] : memref<128x32xbf16, #tpu.memory_space<vmem>>, vector<128x32xbf16>
    %cst_63 = arith.constant dense<0.000000e+00> : vector<16x32xf32>
    %202 = tpu.matmul %200, %201, %cst_63 {dimension_numbers = #tpu.dot_dimension_numbers<[1], [0], [0], [1], [0, 0, 1, 1], [], []>} : vector<16x128xbf16>, vector<128x32xbf16>, vector<16x32xf32> -> vector<16x32xf32>
    %203 = vector.broadcast %7 : vector<1x32xf32> to vector<16x32xf32>
    %204 = arith.addf %202, %203 : vector<16x32xf32>
    %205 = vector.shape_cast %1 : vector<2x8x8xf32> to vector<16x8xf32>
    %cst_64 = arith.constant dense<0.000000e+00> : vector<16xf32>
    %206 = vector.multi_reduction <add>, %205, %cst_64 [1] : vector<16x8xf32> to vector<16xf32>
    %207 = vector.shape_cast %206 : vector<16xf32> to vector<16x1xf32>
    %cst_65 = arith.constant 0.000000e+00 : f32
    %208 = vector.broadcast %cst_65 : f32 to vector<16x1xf32>
    %209 = arith.cmpf ogt, %207, %208 : vector<16x1xf32>
    %cst_66 = arith.constant 0.000000e+00 : f32
    %210 = vector.shape_cast %209 : vector<16x1xi1> to vector<16x1xi1>
    %211 = vector.broadcast %210 : vector<16x1xi1> to vector<16x32xi1>
    %212 = vector.broadcast %cst_66 : f32 to vector<16x32xf32>
    %213 = arith.select %211, %204, %212 : vector<16x32xi1>, vector<16x32xf32>
    %214 = arith.addf %159, %213 : vector<16x32xf32>
    %c0_67 = arith.constant 0 : index
    %c0_68 = arith.constant 0 : index
    %215 = vector.load %arg9[%c0_67, %c0_68] : memref<16x32xf32, #tpu.memory_space<vmem>>, vector<16x32xf32>
    tpu.vector_store %arg9[%c0_67, %c0_68], %214 {strides = array<i32>} : memref<16x32xf32, #tpu.memory_space<vmem>>, vector<16x32xf32>,
    return
  }
  func.func @transform_0(%arg0: i32) -> (i32, i32) {
    %c0_i32 = arith.constant 0 : i32
    %c0_i32_0 = arith.constant 0 : i32
    return %arg0, %c0_i32 : i32, i32
  }
  func.func @transform_1(%arg0: i32) -> (i32, i32, i32) {
    %c0_i32 = arith.constant 0 : i32
    %c0_i32_0 = arith.constant 0 : i32
    %c0_i32_1 = arith.constant 0 : i32
    return %arg0, %c0_i32, %c0_i32_0 : i32, i32, i32
  }
  func.func @transform_2(%arg0: i32) -> (i32, i32) {
    %c0_i32 = arith.constant 0 : i32
    %c0_i32_0 = arith.constant 0 : i32
    %c0_i32_1 = arith.constant 0 : i32
    return %c0_i32, %c0_i32_0 : i32, i32
  }
  func.func @transform_3(%arg0: i32) -> (i32, i32) {
    %c0_i32 = arith.constant 0 : i32
    %c0_i32_0 = arith.constant 0 : i32
    %c0_i32_1 = arith.constant 0 : i32
    return %c0_i32, %c0_i32_0 : i32, i32
  }
  func.func @transform_4(%arg0: i32) -> (i32, i32) {
    %c0_i32 = arith.constant 0 : i32
    %c0_i32_0 = arith.constant 0 : i32
    %c0_i32_1 = arith.constant 0 : i32
    return %c0_i32, %c0_i32_0 : i32, i32
  }
  func.func @transform_5(%arg0: i32) -> (i32, i32) {
    %c0_i32 = arith.constant 0 : i32
    %c0_i32_0 = arith.constant 0 : i32
    %c0_i32_1 = arith.constant 0 : i32
    return %c0_i32, %c0_i32_0 : i32, i32
  }
  func.func @transform_6(%arg0: i32) -> (i32, i32) {
    %c0_i32 = arith.constant 0 : i32
    %c0_i32_0 = arith.constant 0 : i32
    %c0_i32_1 = arith.constant 0 : i32
    return %c0_i32, %c0_i32_0 : i32, i32
  }
  func.func @transform_7(%arg0: i32) -> (i32, i32) {
    %c0_i32 = arith.constant 0 : i32
    %c0_i32_0 = arith.constant 0 : i32
    %c0_i32_1 = arith.constant 0 : i32
    return %c0_i32, %c0_i32_0 : i32, i32
  }
  func.func @transform_8(%arg0: i32) -> (i32, i32) {
    %c0_i32 = arith.constant 0 : i32
    %c0_i32_0 = arith.constant 0 : i32
    return %arg0, %c0_i32 : i32, i32
  }
}

</mosaic_0001>

<llo_original>
// kernel: tpu_custom_call.1
$region0: #{tpu_custom_call.1}
  #allocation0 [shape = 'u32[]', space=smem, size = 0x4, offset = 0x4, fixed_abs, tag = 'smem constant byte address 0x4 - core index']
  #allocation1 [shape = 'u32[72,128]{1,0:T(1,128)}', space=vmem, size = 0x9000, scoped, tag = 'internal scratch']
  %s0 = inlined_call_operand.vmem [shape: f32[16,32], index: 0, kind: input, shape index: {}]
  %s1 = inlined_call_operand.vmem [shape: f32[2,8,8], index: 1, kind: input, shape index: {}]
  %s2 = inlined_call_operand.vmem [shape: bf16[32,96], index: 2, kind: input, shape index: {}]
  %s3 = inlined_call_operand.vmem [shape: bf16[32,32], index: 3, kind: input, shape index: {}]
  %s4 = inlined_call_operand.vmem [shape: bf16[32,128], index: 4, kind: input, shape index: {}]
  %s5 = inlined_call_operand.vmem [shape: bf16[128,32], index: 5, kind: input, shape index: {}]
  %s6 = inlined_call_operand.vmem [shape: f32[1,128], index: 6, kind: input, shape index: {}]
  %s7 = inlined_call_operand.hbm [shape: f32[5,32], index: 7, kind: input, shape index: {}]
  %s8 = inlined_call_operand.hbm [shape: f32[16,32], index: 8, kind: output, shape index: {}]
  %s9 = sld [smem:[#allocation0]]
  $region46: #{tpu_custom_call.1} parent=0
    _
  %s11 = ssub.s32 1, %s9
  %s12 = scalar_select 0, %s11, %s9
  $region1: #{tpu_custom_call.1} parent=0
    #allocation2 [shape = 'u8[4096]{0}', space=vmem, size = 0x1000, scoped, tag = 'input window, operand 7, single buffered']
    #allocation3 [shape = 's32[1]{0}', space=sflag, size = 0x4, scoped, tag = 'scoped memory for tpu_custom_call.1']
    #allocation4 [shape = 's32[1]{0}', space=sflag, size = 0x4, scoped, tag = 'scoped memory for tpu_custom_call.1']
    #allocation5 [shape = 'u8[8192]{0}', space=vmem, size = 0x2000, scoped, tag = 'output window, operand 0, single buffered']
    %13 = vsyncpa [#allocation3], 0
    %14 = vsyncpa [#allocation4], 0
    // Predicated region
    $region2: #{tpu_custom_call.1} parent=1 // pred_check
      _
    $region3: #{tpu_custom_call.1} parent=1 // pred_check_branch
      %16 = sbr.rel (0) target = $region5
    $region4: #{tpu_custom_call.1} parent=1 // pred_region
      _
    $region5: #{tpu_custom_call.1} parent=1 // pred_fallthru
      _
    // Predicated region
    $region6: #{tpu_custom_call.1} parent=1 // pred_check
      _
    $region7: #{tpu_custom_call.1} parent=1 // pred_check_branch
      %18 = sbr.rel (0) target = $region9
    $region8: #{tpu_custom_call.1} parent=1 // pred_region
      _
    $region9: #{tpu_custom_call.1} parent=1 // pred_fallthru
      _
    // Predicated region
    $region10: #{tpu_custom_call.1} parent=1 // pred_check
      _
    $region11: #{tpu_custom_call.1} parent=1 // pred_check_branch
      %20 = sbr.rel (0) target = $region13
    $region12: #{tpu_custom_call.1} parent=1 // pred_region
      _
    $region13: #{tpu_custom_call.1} parent=1 // pred_fallthru
      _
    // Predicated region
    $region14: #{tpu_custom_call.1} parent=1 // pred_check
      _
    $region15: #{tpu_custom_call.1} parent=1 // pred_check_branch
      %22 = sbr.rel (0) target = $region17
    $region16: #{tpu_custom_call.1} parent=1 // pred_region
      _
    $region17: #{tpu_custom_call.1} parent=1 // pred_fallthru
      _
    // Predicated region
    $region18: #{tpu_custom_call.1} parent=1 // pred_check
      _
    $region19: #{tpu_custom_call.1} parent=1 // pred_check_branch
      %24 = sbr.rel (0) target = $region21
    $region20: #{tpu_custom_call.1} parent=1 // pred_region
      _
    $region21: #{tpu_custom_call.1} parent=1 // pred_fallthru
      _
    // Predicated region
    $region22: #{tpu_custom_call.1} parent=1 // pred_check
      _
    $region23: #{tpu_custom_call.1} parent=1 // pred_check_branch
      %26 = sbr.rel (0) target = $region25
    $region24: #{tpu_custom_call.1} parent=1 // pred_region
      _
    $region25: #{tpu_custom_call.1} parent=1 // pred_fallthru
      _
    // Predicated region
    $region26: #{tpu_custom_call.1} parent=1 // pred_check
      _
    $region27: #{tpu_custom_call.1} parent=1 // pred_check_branch
      %28 = sbr.rel (0) target = $region29
    $region28: #{tpu_custom_call.1} parent=1 // pred_region
      _
    $region29: #{tpu_custom_call.1} parent=1 // pred_fallthru
      _
    // Predicated region
    $region30: #{tpu_custom_call.1} parent=1 // pred_check
      _
    $region31: #{tpu_custom_call.1} parent=1 // pred_check_branch
      %30 = sbr.rel (0) target = $region33
    $region32: #{tpu_custom_call.1} parent=1 // pred_region
      %32 = vsyncadd [#allocation3], 0
      %s34 = sshll.u32 %s7, 4
      %s35 = int_to_ptr.hbm [resolvable:$true] %s34
      %s36 = sshll.u32 [#allocation2], 4
      %s37 = int_to_ptr.vmem [resolvable:$true] %s36
      %39 = dma.hbm_to_vmem [thread:$0]  %s35, 128, %s37, [#allocation3]
    $region33: #{tpu_custom_call.1} parent=1 // pred_fallthru
      _
    // Predicated region
    $region34: #{tpu_custom_call.1} parent=1 // pred_check
      _
    $region35: #{tpu_custom_call.1} parent=1 // pred_check_branch
      %41 = sbr.rel (0) target = $region37
    $region36: #{tpu_custom_call.1} parent=1 // pred_region
      %43 = dma.done [#allocation3], 128
    $region37: #{tpu_custom_call.1} parent=1 // pred_fallthru
      _
    %v45 = vld [vmem:[%s0] sm:$0xff]
    %v46 = vld [vmem:[%s0 + $0x8] sm:$0xff]
    %v47 = vld [vmem:[%s1] sm:$0xff]
    %v48 = vld [vmem:[%s1 + $0x8] sm:$0xff]
    %v49 = vld [vmem:[#allocation2] sm:$0x1f]
    %v50 = vld [vmem:[%s6] sm:$0x1]
    %vm51 = vcmask 261120
    %v52 = vsel %vm51, %v45, 0.0
    %53 = vadd.xlane.f32.xlu0 %v52
    %v54 = vpop.xlane.xlu0 %53
    %v55 = vsel %vm51, %v46, 0.0
    %56 = vadd.xlane.f32.xlu0 %v55
    %v57 = vpop.xlane.xlu0 %56
    %v58 = vrcp.pop 32.0
    %v59 = vmul.f32 32.0, %v58
    %v60 = vsub.f32 1.0, %v59
    %v61 = vmul.f32 %v58, %v60
    %v62 = vadd.f32 %v58, %v61
    %vm63 = vweird.f32 %v58
    %v64 = vsel %vm63, %v58, %v62
    %v65 = vmul.f32 %v54, %v64
    %v66 = vmul.f32 %v57, %v64
    %v67 = vsub.f32 %v45, %v65
    %v68 = vsub.f32 %v46, %v66
    %v69 = vmul.f32 %v67, %v67
    %v70 = vmul.f32 %v68, %v68
    %v71 = vsel %vm51, %v69, 0.0
    %72 = vadd.xlane.f32.xlu0 %v71
    %v73 = vpop.xlane.xlu0 %72
    %v74 = vsel %vm51, %v70, 0.0
    %75 = vadd.xlane.f32.xlu0 %v74
    %v76 = vpop.xlane.xlu0 %75
    %v77 = vmul.f32 %v73, %v64
    %v78 = vmul.f32 %v76, %v64
    %v79 = vadd.f32 %v77, 1e-05
    %v80 = vadd.f32 %v78, 1e-05
    %v81 = vrsqrt.pop %v79
    %v82 = vmul.f32 %v81, %v79
    %v83 = vmul.f32 %v82, %v81
    %v84 = vmul.f32 0.5, %v83
    %v85 = vsub.f32 1.5, %v84
    %v86 = vmul.f32 %v81, %v85
    %vm87 = vweird.f32 %v79
    %vm88 = vweird.f32 %v81
    %vm89 = vmor %vm87, %vm88
    %v90 = vsel %vm89, %v81, %v86
    %v91 = vrsqrt.pop %v80
    %v92 = vmul.f32 %v91, %v80
    %v93 = vmul.f32 %v92, %v91
    %v94 = vmul.f32 0.5, %v93
    %v95 = vsub.f32 1.5, %v94
    %v96 = vmul.f32 %v91, %v95
    %vm97 = vweird.f32 %v80
    %vm98 = vweird.f32 %v91
    %vm99 = vmor %vm97, %vm98
    %v100 = vsel %vm99, %v91, %v96
    %v101 = vmul.f32 %v67, %v90
    %v102 = vmul.f32 %v68, %v100
    %v103 = vperm.slane %v49, 0
    %v104 = vmul.f32 %v101, %v103
    %v105 = vmul.f32 %v102, %v103
    %v106 = vperm.slane %v49, 1
    %v107 = vadd.f32 %v104, %v106
    %v108 = vadd.f32 %v105, %v106
    %v109 = vpack.c.bf16 %v108, %v107
    %v110 = vld [vmem:[%s2] sm:$0xf]
    %v111 = vld [vmem:[%s2 + $0x4] sm:$0xf]
    %v112 = vld [vmem:[%s2 + $0x8] sm:$0xf]
    %v113 = vld [vmem:[%s2 + $0xc] sm:$0xf]
    %v118 = vunpack.c.l.b16 %v110
    %v119 = vunpack.c.l.b16 %v111
    %v120 = vunpack.c.l.b16 %v112
    %v121 = vunpack.c.l.b16 %v113
    %v122 = vpack.c.b16 %v119, %v118
    %v123 = vpack.c.b16 %v121, %v120
    %v127 = vsel %vm51, %v109, 0
    %129 = vmatpush.bf16.msra.mxu0 0
    %130 = vmatpush.bf16.msra.mxu0 0
    %131 = vmatpush.bf16.msra.mxu0 0
    %132 = vmatpush.bf16.msra.mxu0 0
    %133 = vmatpush.bf16.msra.mxu0 0
    %134 = vmatpush.bf16.msra.mxu0 0
    %135 = vmatpush.bf16.msra.mxu0 %v123
    %136 = vmatpush.bf16.msra.mxu0 %v122
    %137 = vmatmul.bf16.gmra.mxu0 %v127
    %v138 = vpop.f32.mrf.mxu0
    %v139 = vadd.f32 0.0, %v138
    %v140 = vpop.f32.mrf.mxu0
    %v141 = vadd.f32 0.0, %v140
    %142 = vdwg.mxu0
    %v143 = vpack.c.bf16 %v139, %v139
    %v144 = vpack.c.bf16 %v141, %v141
    %v146 = vunpack.c.l.b16 %v143
    %v147 = vpack.c.b16 %v146, %v146
    %148 = vrot.lane.b32.xlu0 %v147, 96
    %v149 = vpop.permute.xlu0 %148
    %vm150 = vcmask 64512
    %v152 = vsel %vm150, %v143, 0
    %v155 = vsel %vm150, %v149, 0
    %157 = vmatpush.bf16.xpose.msra.mxu0 0
    %158 = vmatpush.bf16.xpose.msra.mxu0 0
    %159 = vmatpush.bf16.xpose.msra.mxu0 0
    %160 = vmatpush.bf16.xpose.msra.mxu0 0
    %161 = vmatpush.bf16.xpose.msra.mxu0 0
    %162 = vmatpush.bf16.xpose.msra.mxu0 0
    %163 = vmatpush.bf16.xpose.msra.mxu0 0
    %164 = vmatpush.bf16.xpose.msra.mxu0 %v155
    %165 = vmatmul.bf16.gmra.mxu0 %v152
    %v166 = vpop.f32.mrf.mxu0
    %v167 = vadd.f32 0.0, %v166
    %v168 = vpop.f32.mrf.mxu0
    %169 = vdwg.mxu0
    %v171 = vunpack.c.l.b16 %v144
    %v172 = vpack.c.b16 %v171, %v171
    %173 = vrot.lane.b32.xlu0 %v172, 96
    %v174 = vpop.permute.xlu0 %173
    %v176 = vsel %vm150, %v144, 0
    %v179 = vsel %vm150, %v174, 0
    %181 = vmatpush.bf16.xpose.msra.mxu0 0
    %182 = vmatpush.bf16.xpose.msra.mxu0 0
    %183 = vmatpush.bf16.xpose.msra.mxu0 0
    %184 = vmatpush.bf16.xpose.msra.mxu0 0
    %185 = vmatpush.bf16.xpose.msra.mxu0 0
    %186 = vmatpush.bf16.xpose.msra.mxu0 0
    %187 = vmatpush.bf16.xpose.msra.mxu0 0
    %188 = vmatpush.bf16.xpose.msra.mxu0 %v179
    %189 = vmatmul.bf16.gmra.mxu0 %v176
    %v190 = vpop.f32.mrf.mxu0
    %v191 = vadd.f32 0.0, %v190
    %v192 = vpop.f32.mrf.mxu0
    %193 = vdwg.mxu0
    %v194 = vmul.f32 %v167, 0.35355338
    %v195 = vmul.f32 %v191, 0.35355338
    %v196 = vsel %vm150, %v194, -inf
    %197 = vmax.xlane.f32.xlu0 %v196
    %v198 = vpop.xlane.xlu0 %197
    %v199 = vsel %vm150, %v195, -inf
    %200 = vmax.xlane.f32.xlu0 %v199
    %v201 = vpop.xlane.xlu0 %200
    %v202 = vsub.f32 %v194, %v198
    %v203 = vsub.f32 %v195, %v201
    %v204 = vmul.f32 %v202, 1.442695
    %v205 = vpow.pop %v204
    %v206 = vmul.f32 %v203, 1.442695
    %v207 = vpow.pop %v206
    %v208 = vmul.f32 %v205, %v47
    %v209 = vmul.f32 %v207, %v48
    %v210 = vsel %vm150, %v208, 0.0
    %211 = vadd.xlane.f32.xlu0 %v210
    %v212 = vpop.xlane.xlu0 %211
    %v213 = vsel %vm150, %v209, 0.0
    %214 = vadd.xlane.f32.xlu0 %v213
    %v215 = vpop.xlane.xlu0 %214
    %v216 = vmax.f32 %v212, 1e-30
    %v217 = vmax.f32 %v215, 1e-30
    %v218 = vrcp.pop %v216
    %v219 = vmul.f32 %v216, %v218
    %v220 = vsub.f32 1.0, %v219
    %v221 = vmul.f32 %v218, %v220
    %v222 = vadd.f32 %v218, %v221
    %vm223 = vweird.f32 %v216
    %vm224 = vweird.f32 %v218
    %vm225 = vmor %vm223, %vm224
    %v226 = vsel %vm225, %v218, %v222
    %v227 = vand.u32 2147483647, %v216
    %vm228 = vcmp.eq.f32.partialorder %v227, 8.507059e+37
    %v229 = vand.u32 %v216, 2147483648
    %v230 = vor.u32 1.1754944e-38, %v229
    %v231 = vsel %vm228, %v230, %v226
    %v232 = vmul.f32 %v208, %v231
    %v233 = vrcp.pop %v217
    %v234 = vmul.f32 %v217, %v233
    %v235 = vsub.f32 1.0, %v234
    %v236 = vmul.f32 %v233, %v235
    %v237 = vadd.f32 %v233, %v236
    %vm238 = vweird.f32 %v217
    %vm239 = vweird.f32 %v233
    %vm240 = vmor %vm238, %vm239
    %v241 = vsel %vm240, %v233, %v237
    %v242 = vand.u32 2147483647, %v217
    %vm243 = vcmp.eq.f32.partialorder %v242, 8.507059e+37
    %v244 = vand.u32 %v217, 2147483648
    %v245 = vor.u32 1.1754944e-38, %v244
    %v246 = vsel %vm243, %v245, %v241
    %v247 = vmul.f32 %v209, %v246
    %v248 = vpack.c.bf16 %v232, %v232
    %v249 = vpack.c.bf16 %v247, %v247
    %250 = vrot.lane.b32.xlu0 %v147, 64
    %v251 = vpop.permute.xlu0 %250
    %v253 = vsel %vm150, %v248, 0
    %vm255 = vcmask 1043456
    %v257 = vsel %vm255, %v251, 0
    %259 = vmatpush.bf16.msra.mxu0 0
    %260 = vmatpush.bf16.msra.mxu0 0
    %261 = vmatpush.bf16.msra.mxu0 0
    %262 = vmatpush.bf16.msra.mxu0 0
    %263 = vmatpush.bf16.msra.mxu0 0
    %264 = vmatpush.bf16.msra.mxu0 0
    %265 = vmatpush.bf16.msra.mxu0 0
    %266 = vmatpush.bf16.msra.mxu0 %v257
    %267 = vmatmul.bf16.gmra.mxu0 %v253
    %v268 = vpop.f32.mrf.mxu0
    %v269 = vadd.f32 0.0, %v268
    %v270 = vpop.f32.mrf.mxu0
    %271 = vdwg.mxu0
    %272 = vrot.lane.b32.xlu0 %v172, 64
    %v273 = vpop.permute.xlu0 %272
    %v275 = vsel %vm150, %v249, 0
    %v278 = vsel %vm255, %v273, 0
    %280 = vmatpush.bf16.msra.mxu0 0
    %281 = vmatpush.bf16.msra.mxu0 0
    %282 = vmatpush.bf16.msra.mxu0 0
    %283 = vmatpush.bf16.msra.mxu0 0
    %284 = vmatpush.bf16.msra.mxu0 0
    %285 = vmatpush.bf16.msra.mxu0 0
    %286 = vmatpush.bf16.msra.mxu0 0
    %287 = vmatpush.bf16.msra.mxu0 %v278
    %288 = vmatmul.bf16.gmra.mxu0 %v275
    %v289 = vpop.f32.mrf.mxu0
    %v290 = vadd.f32 0.0, %v289
    %v291 = vpop.f32.mrf.mxu0
    %292 = vdwg.mxu0
    %v293 = vpack.c.bf16 %v290, %v269
    %v294 = vld [vmem:[%s3] sm:$0xf]
    %295 = vrot.lane.b32.xlu0 %v147, 120
    %v296 = vpop.permute.xlu0 %295
    %297 = vrot.lane.b32.xlu0 %v147, 88
    %v298 = vpop.permute.xlu0 %297
    %v300 = vsel %vm150, %v296, 0
    %v303 = vsel %vm150, %v298, 0
    %305 = vmatpush.bf16.xpose.msra.mxu0 0
    %306 = vmatpush.bf16.xpose.msra.mxu0 0
    %307 = vmatpush.bf16.xpose.msra.mxu0 0
    %308 = vmatpush.bf16.xpose.msra.mxu0 0
    %309 = vmatpush.bf16.xpose.msra.mxu0 0
    %310 = vmatpush.bf16.xpose.msra.mxu0 0
    %311 = vmatpush.bf16.xpose.msra.mxu0 0
    %312 = vmatpush.bf16.xpose.msra.mxu0 %v303
    %313 = vmatmul.bf16.gmra.mxu0 %v300
    %v314 = vpop.f32.mrf.mxu0
    %v315 = vadd.f32 0.0, %v314
    %v316 = vpop.f32.mrf.mxu0
    %317 = vdwg.mxu0
    %318 = vrot.lane.b32.xlu0 %v172, 120
    %v319 = vpop.permute.xlu0 %318
    %320 = vrot.lane.b32.xlu0 %v172, 88
    %v321 = vpop.permute.xlu0 %320
    %v323 = vsel %vm150, %v319, 0
    %v326 = vsel %vm150, %v321, 0
    %328 = vmatpush.bf16.xpose.msra.mxu0 0
    %329 = vmatpush.bf16.xpose.msra.mxu0 0
    %330 = vmatpush.bf16.xpose.msra.mxu0 0
    %331 = vmatpush.bf16.xpose.msra.mxu0 0
    %332 = vmatpush.bf16.xpose.msra.mxu0 0
    %333 = vmatpush.bf16.xpose.msra.mxu0 0
    %334 = vmatpush.bf16.xpose.msra.mxu0 0
    %335 = vmatpush.bf16.xpose.msra.mxu0 %v326
    %336 = vmatmul.bf16.gmra.mxu0 %v323
    %v337 = vpop.f32.mrf.mxu0
    %v338 = vadd.f32 0.0, %v337
    %v339 = vpop.f32.mrf.mxu0
    %340 = vdwg.mxu0
    %v341 = vmul.f32 %v315, 0.35355338
    %v342 = vmul.f32 %v338, 0.35355338
    %v343 = vsel %vm150, %v341, -inf
    %344 = vmax.xlane.f32.xlu0 %v343
    %v345 = vpop.xlane.xlu0 %344
    %v346 = vsel %vm150, %v342, -inf
    %347 = vmax.xlane.f32.xlu0 %v346
    %v348 = vpop.xlane.xlu0 %347
    %v349 = vsub.f32 %v341, %v345
    %v350 = vsub.f32 %v342, %v348
    %v351 = vmul.f32 %v349, 1.442695
    %v352 = vpow.pop %v351
    %v353 = vmul.f32 %v350, 1.442695
    %v354 = vpow.pop %v353
    %v355 = vmul.f32 %v352, %v47
    %v356 = vmul.f32 %v354, %v48
    %v357 = vsel %vm150, %v355, 0.0
    %358 = vadd.xlane.f32.xlu0 %v357
    %v359 = vpop.xlane.xlu0 %358
    %v360 = vsel %vm150, %v356, 0.0
    %361 = vadd.xlane.f32.xlu0 %v360
    %v362 = vpop.xlane.xlu0 %361
    %v363 = vmax.f32 %v359, 1e-30
    %v364 = vmax.f32 %v362, 1e-30
    %v365 = vrcp.pop %v363
    %v366 = vmul.f32 %v363, %v365
    %v367 = vsub.f32 1.0, %v366
    %v368 = vmul.f32 %v365, %v367
    %v369 = vadd.f32 %v365, %v368
    %vm370 = vweird.f32 %v363
    %vm371 = vweird.f32 %v365
    %vm372 = vmor %vm370, %vm371
    %v373 = vsel %vm372, %v365, %v369
    %v374 = vand.u32 2147483647, %v363
    %vm375 = vcmp.eq.f32.partialorder %v374, 8.507059e+37
    %v376 = vand.u32 %v363, 2147483648
    %v377 = vor.u32 1.1754944e-38, %v376
    %v378 = vsel %vm375, %v377, %v373
    %v379 = vmul.f32 %v355, %v378
    %v380 = vrcp.pop %v364
    %v381 = vmul.f32 %v364, %v380
    %v382 = vsub.f32 1.0, %v381
    %v383 = vmul.f32 %v380, %v382
    %v384 = vadd.f32 %v380, %v383
    %vm385 = vweird.f32 %v364
    %vm386 = vweird.f32 %v380
    %vm387 = vmor %vm385, %vm386
    %v388 = vsel %vm387, %v380, %v384
    %v389 = vand.u32 2147483647, %v364
    %vm390 = vcmp.eq.f32.partialorder %v389, 8.507059e+37
    %v391 = vand.u32 %v364, 2147483648
    %v392 = vor.u32 1.1754944e-38, %v391
    %v393 = vsel %vm390, %v392, %v388
    %v394 = vmul.f32 %v356, %v393
    %v395 = vpack.c.bf16 %v379, %v379
    %v396 = vpack.c.bf16 %v394, %v394
    %397 = vrot.lane.b32.xlu0 %v147, 56
    %v398 = vpop.permute.xlu0 %397
    %v400 = vsel %vm150, %v395, 0
    %v403 = vsel %vm255, %v398, 0
    %405 = vmatpush.bf16.msra.mxu0 0
    %406 = vmatpush.bf16.msra.mxu0 0
    %407 = vmatpush.bf16.msra.mxu0 0
    %408 = vmatpush.bf16.msra.mxu0 0
    %409 = vmatpush.bf16.msra.mxu0 0
    %410 = vmatpush.bf16.msra.mxu0 0
    %411 = vmatpush.bf16.msra.mxu0 0
    %412 = vmatpush.bf16.msra.mxu0 %v403
    %413 = vmatmul.bf16.gmra.mxu0 %v400
    %v414 = vpop.f32.mrf.mxu0
    %v415 = vadd.f32 0.0, %v414
    %v416 = vpop.f32.mrf.mxu0
    %417 = vdwg.mxu0
    %418 = vrot.lane.b32.xlu0 %v172, 56
    %v419 = vpop.permute.xlu0 %418
    %v421 = vsel %vm150, %v396, 0
    %v424 = vsel %vm255, %v419, 0
    %426 = vmatpush.bf16.msra.mxu0 0
    %427 = vmatpush.bf16.msra.mxu0 0
    %428 = vmatpush.bf16.msra.mxu0 0
    %429 = vmatpush.bf16.msra.mxu0 0
    %430 = vmatpush.bf16.msra.mxu0 0
    %431 = vmatpush.bf16.msra.mxu0 0
    %432 = vmatpush.bf16.msra.mxu0 0
    %433 = vmatpush.bf16.msra.mxu0 %v424
    %434 = vmatmul.bf16.gmra.mxu0 %v421
    %v435 = vpop.f32.mrf.mxu0
    %v436 = vadd.f32 0.0, %v435
    %v437 = vpop.f32.mrf.mxu0
    %438 = vdwg.mxu0
    %v439 = vpack.c.bf16 %v436, %v415
    %v440 = vld [vmem:[%s3 + $0x4] sm:$0xf]
    %v442 = vsel %vm150, %v439, 0
    %v445 = vsel %vm255, %v440, 0
    %447 = vmatpush.bf16.msra.mxu0 0
    %448 = vmatpush.bf16.msra.mxu0 0
    %449 = vmatpush.bf16.msra.mxu0 0
    %450 = vmatpush.bf16.msra.mxu0 0
    %451 = vmatpush.bf16.msra.mxu0 0
    %452 = vmatpush.bf16.msra.mxu0 0
    %453 = vmatpush.bf16.msra.mxu0 0
    %454 = vmatpush.bf16.msra.mxu0 %v445
    %455 = vmatmul.bf16.gmra.mxu0 %v442
    %v456 = vpop.f32.mrf.mxu0
    %v457 = vadd.f32 0.0, %v456
    %v458 = vpop.f32.mrf.mxu0
    %v459 = vadd.f32 0.0, %v458
    %460 = vdwg.mxu0
    %v462 = vsel %vm150, %v293, 0
    %v465 = vsel %vm255, %v294, 0
    %467 = vmatpush.bf16.msra.mxu0 0
    %468 = vmatpush.bf16.msra.mxu0 0
    %469 = vmatpush.bf16.msra.mxu0 0
    %470 = vmatpush.bf16.msra.mxu0 0
    %471 = vmatpush.bf16.msra.mxu0 0
    %472 = vmatpush.bf16.msra.mxu0 0
    %473 = vmatpush.bf16.msra.mxu0 0
    %474 = vmatpush.bf16.msra.mxu0 %v465
    %475 = vmatmul.bf16.gmra.mxu0 %v462
    %v476 = vpop.f32.mrf.mxu0
    %v477 = vadd.f32 %v457, %v476
    %v478 = vpop.f32.mrf.mxu0
    %v479 = vadd.f32 %v459, %v478
    %480 = vdwg.mxu0
    %481 = vrot.lane.b32.xlu0 %v147, 112
    %v482 = vpop.permute.xlu0 %481
    %483 = vrot.lane.b32.xlu0 %v147, 80
    %v484 = vpop.permute.xlu0 %483
    %v486 = vsel %vm150, %v482, 0
    %v489 = vsel %vm150, %v484, 0
    %491 = vmatpush.bf16.xpose.msra.mxu0 0
    %492 = vmatpush.bf16.xpose.msra.mxu0 0
    %493 = vmatpush.bf16.xpose.msra.mxu0 0
    %494 = vmatpush.bf16.xpose.msra.mxu0 0
    %495 = vmatpush.bf16.xpose.msra.mxu0 0
    %496 = vmatpush.bf16.xpose.msra.mxu0 0
    %497 = vmatpush.bf16.xpose.msra.mxu0 0
    %498 = vmatpush.bf16.xpose.msra.mxu0 %v489
    %499 = vmatmul.bf16.gmra.mxu0 %v486
    %v500 = vpop.f32.mrf.mxu0
    %v501 = vadd.f32 0.0, %v500
    %v502 = vpop.f32.mrf.mxu0
    %503 = vdwg.mxu0
    %504 = vrot.lane.b32.xlu0 %v172, 112
    %v505 = vpop.permute.xlu0 %504
    %506 = vrot.lane.b32.xlu0 %v172, 80
    %v507 = vpop.permute.xlu0 %506
    %v509 = vsel %vm150, %v505, 0
    %v512 = vsel %vm150, %v507, 0
    %514 = vmatpush.bf16.xpose.msra.mxu0 0
    %515 = vmatpush.bf16.xpose.msra.mxu0 0
    %516 = vmatpush.bf16.xpose.msra.mxu0 0
    %517 = vmatpush.bf16.xpose.msra.mxu0 0
    %518 = vmatpush.bf16.xpose.msra.mxu0 0
    %519 = vmatpush.bf16.xpose.msra.mxu0 0
    %520 = vmatpush.bf16.xpose.msra.mxu0 0
    %521 = vmatpush.bf16.xpose.msra.mxu0 %v512
    %522 = vmatmul.bf16.gmra.mxu0 %v509
    %v523 = vpop.f32.mrf.mxu0
    %v524 = vadd.f32 0.0, %v523
    %v525 = vpop.f32.mrf.mxu0
    %526 = vdwg.mxu0
    %v527 = vmul.f32 %v501, 0.35355338
    %v528 = vmul.f32 %v524, 0.35355338
    %v529 = vsel %vm150, %v527, -inf
    %530 = vmax.xlane.f32.xlu0 %v529
    %v531 = vpop.xlane.xlu0 %530
    %v532 = vsel %vm150, %v528, -inf
    %533 = vmax.xlane.f32.xlu0 %v532
    %v534 = vpop.xlane.xlu0 %533
    %v535 = vsub.f32 %v527, %v531
    %v536 = vsub.f32 %v528, %v534
    %v537 = vmul.f32 %v535, 1.442695
    %v538 = vpow.pop %v537
    %v539 = vmul.f32 %v536, 1.442695
    %v540 = vpow.pop %v539
    %v541 = vmul.f32 %v538, %v47
    %v542 = vmul.f32 %v540, %v48
    %v543 = vsel %vm150, %v541, 0.0
    %544 = vadd.xlane.f32.xlu0 %v543
    %v545 = vpop.xlane.xlu0 %544
    %v546 = vsel %vm150, %v542, 0.0
    %547 = vadd.xlane.f32.xlu0 %v546
    %v548 = vpop.xlane.xlu0 %547
    %v549 = vmax.f32 %v545, 1e-30
    %v550 = vmax.f32 %v548, 1e-30
    %v551 = vrcp.pop %v549
    %v552 = vmul.f32 %v549, %v551
    %v553 = vsub.f32 1.0, %v552
    %v554 = vmul.f32 %v551, %v553
    %v555 = vadd.f32 %v551, %v554
    %vm556 = vweird.f32 %v549
    %vm557 = vweird.f32 %v551
    %vm558 = vmor %vm556, %vm557
    %v559 = vsel %vm558, %v551, %v555
    %v560 = vand.u32 2147483647, %v549
    %vm561 = vcmp.eq.f32.partialorder %v560, 8.507059e+37
    %v562 = vand.u32 %v549, 2147483648
    %v563 = vor.u32 1.1754944e-38, %v562
    %v564 = vsel %vm561, %v563, %v559
    %v565 = vmul.f32 %v541, %v564
    %v566 = vrcp.pop %v550
    %v567 = vmul.f32 %v550, %v566
    %v568 = vsub.f32 1.0, %v567
    %v569 = vmul.f32 %v566, %v568
    %v570 = vadd.f32 %v566, %v569
    %vm571 = vweird.f32 %v550
    %vm572 = vweird.f32 %v566
    %vm573 = vmor %vm571, %vm572
    %v574 = vsel %vm573, %v566, %v570
    %v575 = vand.u32 2147483647, %v550
    %vm576 = vcmp.eq.f32.partialorder %v575, 8.507059e+37
    %v577 = vand.u32 %v550, 2147483648
    %v578 = vor.u32 1.1754944e-38, %v577
    %v579 = vsel %vm576, %v578, %v574
    %v580 = vmul.f32 %v542, %v579
    %v581 = vpack.c.bf16 %v565, %v565
    %v582 = vpack.c.bf16 %v580, %v580
    %583 = vrot.lane.b32.xlu0 %v147, 48
    %v584 = vpop.permute.xlu0 %583
    %v586 = vsel %vm150, %v581, 0
    %v589 = vsel %vm255, %v584, 0
    %591 = vmatpush.bf16.msra.mxu0 0
    %592 = vmatpush.bf16.msra.mxu0 0
    %593 = vmatpush.bf16.msra.mxu0 0
    %594 = vmatpush.bf16.msra.mxu0 0
    %595 = vmatpush.bf16.msra.mxu0 0
    %596 = vmatpush.bf16.msra.mxu0 0
    %597 = vmatpush.bf16.msra.mxu0 0
    %598 = vmatpush.bf16.msra.mxu0 %v589
    %599 = vmatmul.bf16.gmra.mxu0 %v586
    %v600 = vpop.f32.mrf.mxu0
    %v601 = vadd.f32 0.0, %v600
    %v602 = vpop.f32.mrf.mxu0
    %603 = vdwg.mxu0
    %604 = vrot.lane.b32.xlu0 %v172, 48
    %v605 = vpop.permute.xlu0 %604
    %v607 = vsel %vm150, %v582, 0
    %v610 = vsel %vm255, %v605, 0
    %612 = vmatpush.bf16.msra.mxu0 0
    %613 = vmatpush.bf16.msra.mxu0 0
    %614 = vmatpush.bf16.msra.mxu0 0
    %615 = vmatpush.bf16.msra.mxu0 0
    %616 = vmatpush.bf16.msra.mxu0 0
    %617 = vmatpush.bf16.msra.mxu0 0
    %618 = vmatpush.bf16.msra.mxu0 0
    %619 = vmatpush.bf16.msra.mxu0 %v610
    %620 = vmatmul.bf16.gmra.mxu0 %v607
    %v621 = vpop.f32.mrf.mxu0
    %v622 = vadd.f32 0.0, %v621
    %v623 = vpop.f32.mrf.mxu0
    %624 = vdwg.mxu0
    %v625 = vpack.c.bf16 %v622, %v601
    %v626 = vld [vmem:[%s3 + $0x8] sm:$0xf]
    %v628 = vsel %vm150, %v625, 0
    %v631 = vsel %vm255, %v626, 0
    %633 = vmatpush.bf16.msra.mxu0 0
    %634 = vmatpush.bf16.msra.mxu0 0
    %635 = vmatpush.bf16.msra.mxu0 0
    %636 = vmatpush.bf16.msra.mxu0 0
    %637 = vmatpush.bf16.msra.mxu0 0
    %638 = vmatpush.bf16.msra.mxu0 0
    %639 = vmatpush.bf16.msra.mxu0 0
    %640 = vmatpush.bf16.msra.mxu0 %v631
    %641 = vmatmul.bf16.gmra.mxu0 %v628
    %v642 = vpop.f32.mrf.mxu0
    %v643 = vadd.f32 0.0, %v642
    %v644 = vpop.f32.mrf.mxu0
    %v645 = vadd.f32 0.0, %v644
    %646 = vdwg.mxu0
    %v647 = vadd.f32 %v477, %v643
    %v648 = vadd.f32 %v479, %v645
    %649 = vrot.lane.b32.xlu0 %v147, 104
    %v650 = vpop.permute.xlu0 %649
    %651 = vrot.lane.b32.xlu0 %v147, 72
    %v652 = vpop.permute.xlu0 %651
    %v654 = vsel %vm150, %v650, 0
    %v657 = vsel %vm150, %v652, 0
    %659 = vmatpush.bf16.xpose.msra.mxu0 0
    %660 = vmatpush.bf16.xpose.msra.mxu0 0
    %661 = vmatpush.bf16.xpose.msra.mxu0 0
    %662 = vmatpush.bf16.xpose.msra.mxu0 0
    %663 = vmatpush.bf16.xpose.msra.mxu0 0
    %664 = vmatpush.bf16.xpose.msra.mxu0 0
    %665 = vmatpush.bf16.xpose.msra.mxu0 0
    %666 = vmatpush.bf16.xpose.msra.mxu0 %v657
    %667 = vmatmul.bf16.gmra.mxu0 %v654
    %v668 = vpop.f32.mrf.mxu0
    %v669 = vadd.f32 0.0, %v668
    %v670 = vpop.f32.mrf.mxu0
    %671 = vdwg.mxu0
    %672 = vrot.lane.b32.xlu0 %v172, 104
    %v673 = vpop.permute.xlu0 %672
    %674 = vrot.lane.b32.xlu0 %v172, 72
    %v675 = vpop.permute.xlu0 %674
    %v677 = vsel %vm150, %v673, 0
    %v680 = vsel %vm150, %v675, 0
    %682 = vmatpush.bf16.xpose.msra.mxu0 0
    %683 = vmatpush.bf16.xpose.msra.mxu0 0
    %684 = vmatpush.bf16.xpose.msra.mxu0 0
    %685 = vmatpush.bf16.xpose.msra.mxu0 0
    %686 = vmatpush.bf16.xpose.msra.mxu0 0
    %687 = vmatpush.bf16.xpose.msra.mxu0 0
    %688 = vmatpush.bf16.xpose.msra.mxu0 0
    %689 = vmatpush.bf16.xpose.msra.mxu0 %v680
    %690 = vmatmul.bf16.gmra.mxu0 %v677
    %v691 = vpop.f32.mrf.mxu0
    %v692 = vadd.f32 0.0, %v691
    %v693 = vpop.f32.mrf.mxu0
    %694 = vdwg.mxu0
    %v695 = vmul.f32 %v669, 0.35355338
    %v696 = vmul.f32 %v692, 0.35355338
    %v697 = vsel %vm150, %v695, -inf
    %698 = vmax.xlane.f32.xlu0 %v697
    %v699 = vpop.xlane.xlu0 %698
    %v700 = vsel %vm150, %v696, -inf
    %701 = vmax.xlane.f32.xlu0 %v700
    %v702 = vpop.xlane.xlu0 %701
    %v703 = vsub.f32 %v695, %v699
    %v704 = vsub.f32 %v696, %v702
    %v705 = vmul.f32 %v703, 1.442695
    %v706 = vpow.pop %v705
    %v707 = vmul.f32 %v704, 1.442695
    %v708 = vpow.pop %v707
    %v709 = vmul.f32 %v706, %v47
    %v710 = vmul.f32 %v708, %v48
    %v711 = vsel %vm150, %v709, 0.0
    %712 = vadd.xlane.f32.xlu0 %v711
    %v713 = vpop.xlane.xlu0 %712
    %v714 = vsel %vm150, %v710, 0.0
    %715 = vadd.xlane.f32.xlu0 %v714
    %v716 = vpop.xlane.xlu0 %715
    %v717 = vmax.f32 %v713, 1e-30
    %v718 = vmax.f32 %v716, 1e-30
    %v719 = vrcp.pop %v717
    %v720 = vmul.f32 %v717, %v719
    %v721 = vsub.f32 1.0, %v720
    %v722 = vmul.f32 %v719, %v721
    %v723 = vadd.f32 %v719, %v722
    %vm724 = vweird.f32 %v717
    %vm725 = vweird.f32 %v719
    %vm726 = vmor %vm724, %vm725
    %v727 = vsel %vm726, %v719, %v723
    %v728 = vand.u32 2147483647, %v717
    %vm729 = vcmp.eq.f32.partialorder %v728, 8.507059e+37
    %v730 = vand.u32 %v717, 2147483648
    %v731 = vor.u32 1.1754944e-38, %v730
    %v732 = vsel %vm729, %v731, %v727
    %v733 = vmul.f32 %v709, %v732
    %v734 = vrcp.pop %v718
    %v735 = vmul.f32 %v718, %v734
    %v736 = vsub.f32 1.0, %v735
    %v737 = vmul.f32 %v734, %v736
    %v738 = vadd.f32 %v734, %v737
    %vm739 = vweird.f32 %v718
    %vm740 = vweird.f32 %v734
    %vm741 = vmor %vm739, %vm740
    %v742 = vsel %vm741, %v734, %v738
    %v743 = vand.u32 2147483647, %v718
    %vm744 = vcmp.eq.f32.partialorder %v743, 8.507059e+37
    %v745 = vand.u32 %v718, 2147483648
    %v746 = vor.u32 1.1754944e-38, %v745
    %v747 = vsel %vm744, %v746, %v742
    %v748 = vmul.f32 %v710, %v747
    %v749 = vpack.c.bf16 %v733, %v733
    %v750 = vpack.c.bf16 %v748, %v748
    %751 = vrot.lane.b32.xlu0 %v147, 40
    %v752 = vpop.permute.xlu0 %751
    %v754 = vsel %vm150, %v749, 0
    %v757 = vsel %vm255, %v752, 0
    %759 = vmatpush.bf16.msra.mxu0 0
    %760 = vmatpush.bf16.msra.mxu0 0
    %761 = vmatpush.bf16.msra.mxu0 0
    %762 = vmatpush.bf16.msra.mxu0 0
    %763 = vmatpush.bf16.msra.mxu0 0
    %764 = vmatpush.bf16.msra.mxu0 0
    %765 = vmatpush.bf16.msra.mxu0 0
    %766 = vmatpush.bf16.msra.mxu0 %v757
    %767 = vmatmul.bf16.gmra.mxu0 %v754
    %v768 = vpop.f32.mrf.mxu0
    %v769 = vadd.f32 0.0, %v768
    %v770 = vpop.f32.mrf.mxu0
    %771 = vdwg.mxu0
    %772 = vrot.lane.b32.xlu0 %v172, 40
    %v773 = vpop.permute.xlu0 %772
    %v775 = vsel %vm150, %v750, 0
    %v778 = vsel %vm255, %v773, 0
    %780 = vmatpush.bf16.msra.mxu0 0
    %781 = vmatpush.bf16.msra.mxu0 0
    %782 = vmatpush.bf16.msra.mxu0 0
    %783 = vmatpush.bf16.msra.mxu0 0
    %784 = vmatpush.bf16.msra.mxu0 0
    %785 = vmatpush.bf16.msra.mxu0 0
    %786 = vmatpush.bf16.msra.mxu0 0
    %787 = vmatpush.bf16.msra.mxu0 %v778
    %788 = vmatmul.bf16.gmra.mxu0 %v775
    %v789 = vpop.f32.mrf.mxu0
    %v790 = vadd.f32 0.0, %v789
    %v791 = vpop.f32.mrf.mxu0
    %792 = vdwg.mxu0
    %v793 = vpack.c.bf16 %v790, %v769
    %v794 = vld [vmem:[%s3 + $0xc] sm:$0xf]
    %v796 = vsel %vm150, %v793, 0
    %v799 = vsel %vm255, %v794, 0
    %801 = vmatpush.bf16.msra.mxu0 0
    %802 = vmatpush.bf16.msra.mxu0 0
    %803 = vmatpush.bf16.msra.mxu0 0
    %804 = vmatpush.bf16.msra.mxu0 0
    %805 = vmatpush.bf16.msra.mxu0 0
    %806 = vmatpush.bf16.msra.mxu0 0
    %807 = vmatpush.bf16.msra.mxu0 0
    %808 = vmatpush.bf16.msra.mxu0 %v799
    %809 = vmatmul.bf16.gmra.mxu0 %v796
    %v810 = vpop.f32.mrf.mxu0
    %v811 = vadd.f32 0.0, %v810
    %v812 = vpop.f32.mrf.mxu0
    %v813 = vadd.f32 0.0, %v812
    %814 = vdwg.mxu0
    %v815 = vadd.f32 %v647, %v811
    %v816 = vadd.f32 %v648, %v813
    %v817 = vadd.f32 %v45, %v815
    %v818 = vadd.f32 %v46, %v816
    %v819 = vsel %vm51, %v817, 0.0
    %820 = vadd.xlane.f32.xlu0 %v819
    %v821 = vpop.xlane.xlu0 %820
    %v822 = vsel %vm51, %v818, 0.0
    %823 = vadd.xlane.f32.xlu0 %v822
    %v824 = vpop.xlane.xlu0 %823
    %v825 = vmul.f32 %v821, %v64
    %v826 = vmul.f32 %v824, %v64
    %v827 = vsub.f32 %v817, %v825
    %v828 = vsub.f32 %v818, %v826
    %v829 = vmul.f32 %v827, %v827
    %v830 = vmul.f32 %v828, %v828
    %v831 = vsel %vm51, %v829, 0.0
    %832 = vadd.xlane.f32.xlu0 %v831
    %v833 = vpop.xlane.xlu0 %832
    %v834 = vsel %vm51, %v830, 0.0
    %835 = vadd.xlane.f32.xlu0 %v834
    %v836 = vpop.xlane.xlu0 %835
    %v837 = vmul.f32 %v833, %v64
    %v838 = vmul.f32 %v836, %v64
    %v839 = vadd.f32 %v837, 1e-05
    %v840 = vadd.f32 %v838, 1e-05
    %v841 = vrsqrt.pop %v839
    %v842 = vmul.f32 %v841, %v839
    %v843 = vmul.f32 %v842, %v841
    %v844 = vmul.f32 0.5, %v843
    %v845 = vsub.f32 1.5, %v844
    %v846 = vmul.f32 %v841, %v845
    %vm847 = vweird.f32 %v839
    %vm848 = vweird.f32 %v841
    %vm849 = vmor %vm847, %vm848
    %v850 = vsel %vm849, %v841, %v846
    %v851 = vrsqrt.pop %v840
    %v852 = vmul.f32 %v851, %v840
    %v853 = vmul.f32 %v852, %v851
    %v854 = vmul.f32 0.5, %v853
    %v855 = vsub.f32 1.5, %v854
    %v856 = vmul.f32 %v851, %v855
    %vm857 = vweird.f32 %v840
    %vm858 = vweird.f32 %v851
    %vm859 = vmor %vm857, %vm858
    %v860 = vsel %vm859, %v851, %v856
    %v861 = vmul.f32 %v827, %v850
    %v862 = vmul.f32 %v828, %v860
    %v863 = vperm.slane %v49, 2
    %v864 = vmul.f32 %v861, %v863
    %v865 = vmul.f32 %v862, %v863
    %v866 = vperm.slane %v49, 3
    %v867 = vadd.f32 %v864, %v866
    %v868 = vadd.f32 %v865, %v866
    %v869 = vpack.c.bf16 %v868, %v867
    %v870 = vld [vmem:[%s4] sm:$0xf]
    %v871 = vld [vmem:[%s4 + $0x4] sm:$0xf]
    %v872 = vld [vmem:[%s4 + $0x8] sm:$0xf]
    %v873 = vld [vmem:[%s4 + $0xc] sm:$0xf]
    %v875 = vperm.slane %v50, 0
    %v881 = vunpack.c.l.b16 %v870
    %v882 = vunpack.c.l.b16 %v871
    %v883 = vunpack.c.l.b16 %v872
    %v884 = vunpack.c.l.b16 %v873
    %v885 = vpack.c.b16 %v882, %v881
    %v886 = vpack.c.b16 %v884, %v883
    %v890 = vsel %vm51, %v869, 0
    %892 = vmatpush.bf16.msra.mxu0 0
    %893 = vmatpush.bf16.msra.mxu0 0
    %894 = vmatpush.bf16.msra.mxu0 0
    %895 = vmatpush.bf16.msra.mxu0 0
    %896 = vmatpush.bf16.msra.mxu0 0
    %897 = vmatpush.bf16.msra.mxu0 0
    %898 = vmatpush.bf16.msra.mxu0 %v886
    %899 = vmatpush.bf16.msra.mxu0 %v885
    %900 = vmatmul.bf16.gmra.mxu0 %v890
    %v901 = vpop.f32.mrf.mxu0
    %v902 = vadd.f32 %v875, %v901
    %v903 = vpop.f32.mrf.mxu0
    %v904 = vadd.f32 %v875, %v903
    %905 = vdwg.mxu0
    %v906 = vmul.f32 %v902, %v902
    %v907 = vmul.f32 %v904, %v904
    %v908 = vmul.f32 %v902, %v906
    %v909 = vmul.f32 %v904, %v907
    %v910 = vmul.f32 %v908, 0.044715
    %v911 = vmul.f32 %v909, 0.044715
    %v912 = vadd.f32 %v902, %v910
    %v913 = vadd.f32 %v904, %v911
    %v914 = vmul.f32 %v912, 0.7978846
    %v915 = vmul.f32 %v913, 0.7978846
    %v916 = vtanh.pop %v914
    %v917 = vtanh.pop %v915
    %v918 = vadd.f32 %v916, 1.0
    %v919 = vadd.f32 %v917, 1.0
    %v920 = vmul.f32 %v918, 0.5
    %v921 = vmul.f32 %v919, 0.5
    %v922 = vmul.f32 %v902, %v920
    %v923 = vmul.f32 %v904, %v921
    %v924 = vpack.c.bf16 %v923, %v922
    %v925 = vld [vmem:[%s5] sm:$0xf]
    %v926 = vld [vmem:[%s5 + $0x4] sm:$0xf]
    %v927 = vld [vmem:[%s5 + $0x8] sm:$0xf]
    %v928 = vld [vmem:[%s5 + $0xc] sm:$0xf]
    %v929 = vld [vmem:[%s5 + $0x10] sm:$0xf]
    %v930 = vld [vmem:[%s5 + $0x14] sm:$0xf]
    %v931 = vld [vmem:[%s5 + $0x18] sm:$0xf]
    %v932 = vld [vmem:[%s5 + $0x1c] sm:$0xf]
    %v933 = vld [vmem:[%s5 + $0x20] sm:$0xf]
    %v934 = vld [vmem:[%s5 + $0x24] sm:$0xf]
    %v935 = vld [vmem:[%s5 + $0x28] sm:$0xf]
    %v936 = vld [vmem:[%s5 + $0x2c] sm:$0xf]
    %v937 = vld [vmem:[%s5 + $0x30] sm:$0xf]
    %v938 = vld [vmem:[%s5 + $0x34] sm:$0xf]
    %v939 = vld [vmem:[%s5 + $0x38] sm:$0xf]
    %v940 = vld [vmem:[%s5 + $0x3c] sm:$0xf]
    %v941 = vperm.slane %v49, 4
    %v958 = vunpack.c.l.b16 %v925
    %v959 = vunpack.c.l.b16 %v926
    %v960 = vunpack.c.l.b16 %v927
    %v961 = vunpack.c.l.b16 %v928
    %v962 = vunpack.c.l.b16 %v929
    %v963 = vunpack.c.l.b16 %v930
    %v964 = vunpack.c.l.b16 %v931
    %v965 = vunpack.c.l.b16 %v932
    %v966 = vunpack.c.l.b16 %v933
    %v967 = vunpack.c.l.b16 %v934
    %v968 = vunpack.c.l.b16 %v935
    %v969 = vunpack.c.l.b16 %v936
    %v970 = vunpack.c.l.b16 %v937
    %v971 = vunpack.c.l.b16 %v938
    %v972 = vunpack.c.l.b16 %v939
    %v973 = vunpack.c.l.b16 %v940
    %v974 = vpack.c.b16 %v959, %v958
    %v975 = vpack.c.b16 %v961, %v960
    %v976 = vpack.c.b16 %v963, %v962
    %v977 = vpack.c.b16 %v965, %v964
    %v978 = vpack.c.b16 %v967, %v966
    %v979 = vpack.c.b16 %v969, %v968
    %v980 = vpack.c.b16 %v971, %v970
    %v981 = vpack.c.b16 %v973, %v972
    %990 = vmatpush.bf16.msra.mxu0 %v981
    %991 = vmatpush.bf16.msra.mxu0 %v980
    %992 = vmatpush.bf16.msra.mxu0 %v979
    %993 = vmatpush.bf16.msra.mxu0 %v978
    %994 = vmatpush.bf16.msra.mxu0 %v977
    %995 = vmatpush.bf16.msra.mxu0 %v976
    %996 = vmatpush.bf16.msra.mxu0 %v975
    %997 = vmatpush.bf16.msra.mxu0 %v974
    %998 = vmatmul.bf16.gmra.mxu0 %v924
    %v999 = vpop.f32.mrf.mxu0
    %v1000 = vadd.f32 %v941, %v999
    %v1001 = vpop.f32.mrf.mxu0
    %v1002 = vadd.f32 %v941, %v1001
    %1003 = vdwg.mxu0
    %v1004 = vsel %vm150, %v47, 0.0
    %1005 = vadd.xlane.f32.xlu0 %v1004
    %v1006 = vpop.xlane.xlu0 %1005
    %v1007 = vsel %vm150, %v48, 0.0
    %1008 = vadd.xlane.f32.xlu0 %v1007
    %v1009 = vpop.xlane.xlu0 %1008
    %vm1010 = vcmp.gt.f32.partialorder %v1006, 0.0
    %vm1011 = vcmp.gt.f32.partialorder %v1009, 0.0
    %v1012 = vsel %vm1010, 1, 0
    %v1013 = vsel %vm1011, 1, 0
    %vm1014 = vcmp.eq.s32.totalorder %v1012, 1
    %vm1015 = vcmp.eq.s32.totalorder %v1013, 1
    %v1016 = vsel %vm1014, %v1000, 0.0
    %v1017 = vsel %vm1015, %v1002, 0.0
    %v1018 = vadd.f32 %v817, %v1016
    %v1019 = vadd.f32 %v818, %v1017
    %1020 = vst.msk [vmem:[#allocation5] sm:$0xff] %vm51, %v1018
    %1021 = vst.msk [vmem:[#allocation5 + $0x8] sm:$0xff] %vm51, %v1019
    // Predicated region
    $region38: #{tpu_custom_call.1} parent=1 // pred_check
      _
    $region39: #{tpu_custom_call.1} parent=1 // pred_check_branch
      %1023 = sbr.rel (0) target = $region41
    $region40: #{tpu_custom_call.1} parent=1 // pred_region
      %1025 = vsyncadd [#allocation4], 0
      %s1026 = sshll.u32 [#allocation5], 4
      %s1027 = int_to_ptr.vmem [resolvable:$true] %s1026
      %s1028 = sshll.u32 %s8, 4
      %s1029 = int_to_ptr.hbm [resolvable:$true] %s1028
      %1034 = dma.vmem_to_hbm [thread:$0]  %s1027, 256, %s1029, [#allocation4], 128, 128, 8
    $region41: #{tpu_custom_call.1} parent=1 // pred_fallthru
      _
    // Predicated region
    $region42: #{tpu_custom_call.1} parent=1 // pred_check
      _
    $region43: #{tpu_custom_call.1} parent=1 // pred_check_branch
      %1036 = sbr.rel (0) target = $region45
    $region44: #{tpu_custom_call.1} parent=1 // pred_region
      %1038 = dma.done [#allocation4], 256
    $region45: #{tpu_custom_call.1} parent=1 // pred_fallthru
      _
    %1039 = vsyncpa [#allocation3], 1
    %1040 = vsyncpa [#allocation4], 1

</llo_original>
